<compile_context>
chip_gen: v7x
topology: tpu7x:2x2x1
jax: 0.10.0
libtpu: 0.0.40
codegen_flags: <defaults>
</compile_context>

<pallas_src>
import functools

import jax
import jax.numpy as jnp
from jax import lax
from jax.experimental import pallas as pl
from jax.experimental.pallas import tpu as pltpu


def _round_up(x, m):
    return (x + m - 1) // m * m


def _hd_kernel(enc_ref, hvs_ref, invc_ref, tgt_ref, scores_ref, hvs_out_ref, *scratch,
               batch_size, block_b, block_c, mask_tail, use_bf16_mxu):
    """Grid = (class blocks ["parallel"], batch tiles ["arbitrary"]).

    enc_ref:     (TB, D)   f32  encoded hypervectors (pipelined over batch tiles)
    hvs_ref:     (TC, D)   f32  class hypervectors (resident per class block)
    invc_ref:    (1, TC)   f32  precomputed 1/||class_hv|| (0 for zero-norm/padded classes)
    tgt_ref:     (1, TB)   i32  integer class targets (-1 = padding row)
    scores_ref:  (TB, TC)  f32  cosine-similarity scores (lane-dense tile output)
    hvs_out_ref: (TC, D)   f32  bundled class hypervectors (resident accumulator output)
    scratch[0]:  (TC, D)   bf16 (only when use_bf16_mxu) class block cast once per class block
    """
    c = pl.program_id(0)          # class-block index   (parallel)
    i = pl.program_id(1)          # batch-tile index    (arbitrary, carries the accumulator)

    enc = enc_ref[...]                                               # (TB, D) f32

    # Mask tail rows of the last (partial) batch tile so garbage rows can never reach the
    # scores or the class-HV accumulator.  `mask_tail` is a trace-time Python bool.
    if mask_tail:
        row = i * block_b + lax.broadcasted_iota(jnp.int32, (block_b, 1), 0)
        enc = jnp.where(row < batch_size, enc, 0.0)

    # --- cosine-similarity scores: raw MXU matmul, then scale the small (TB, TC) tile ---
    ssq_e = jnp.sum(enc * enc, axis=1, keepdims=True)                # (TB, 1)
    inv_e = jnp.where(ssq_e > 0, lax.rsqrt(ssq_e), 0.0)              # guard zero/padded rows

    if use_bf16_mxu:
        hvs_bf16_ref = scratch[0]

        @pl.when(i == 0)                                             # once per class block
        def _():
            hvs_bf16_ref[...] = hvs_ref[...].astype(jnp.bfloat16)

        enc_mm = enc.astype(jnp.bfloat16)
        hvs_mm = hvs_bf16_ref[...]
    else:
        enc_mm = enc
        hvs_mm = hvs_ref[...]

    raw = jnp.einsum("bd,cd->bc", enc_mm, hvs_mm,
                     preferred_element_type=jnp.float32)             # (TB, TC) f32 accumulate
    scores_ref[...] = raw * inv_e * invc_ref[...]                    # row * col scaling

    # --- one-shot class bundling: hvs_out[c] = class_hvs[c] + sum_{targets==c} encoded ---
    # one-hot built directly in (TC, TB) layout -> MXU-native (TC,TB)@(TB,D), no transpose.
    cls = c * block_c + lax.broadcasted_iota(jnp.int32, (block_c, block_b), 0)
    onehot = (cls == tgt_ref[...]).astype(jnp.float32)               # (TC, TB)
    update = jnp.dot(onehot, enc, preferred_element_type=jnp.float32)  # f32 (persistent state)

    @pl.when(i == 0)
    def _():
        hvs_out_ref[...] = hvs_ref[...]                              # init resident output

    hvs_out_ref[...] += update


def hd_classifier_forward(encoded, class_hvs, targets, *, tb=256, tc=128,
                          use_bf16_mxu=True):
    """Returns (scores, updated_class_hvs) matching the first-call HDClassifier.forward()."""
    B, D = encoded.shape
    C, Dc = class_hvs.shape
    assert D == Dc

    # Class dim: pad to a lane-dense multiple of 128, tile with TC (parallel grid axis).
    C_pad = _round_up(max(C, 128), 128)
    TC = tc if (tc is not None and tc % 128 == 0 and C_pad % tc == 0) else 128
    grid_c = C_pad // TC

    # Batch dim: NOT padded in HBM; tail tile masked in-kernel.
    TB = _round_up(tb, 8) if B >= tb else _round_up(B, 8)
    grid_b = pl.cdiv(B, TB)
    B_out = grid_b * TB
    mask_tail = (B_out != B)

    enc = encoded if encoded.dtype == jnp.float32 else encoded.astype(jnp.float32)
    hvs = class_hvs if class_hvs.dtype == jnp.float32 else class_hvs.astype(jnp.float32)
    if C_pad != C:
        hvs = jnp.pad(hvs, ((0, C_pad - C), (0, 0)))

    # Loop-invariant class inverse-norms, precomputed once (lane-friendly (1, C_pad) row).
    ssq_c = jnp.sum(hvs * hvs, axis=1)
    inv_c = jnp.where(ssq_c > 0, lax.rsqrt(ssq_c), 0.0).reshape(1, C_pad)

    tgt = jnp.full((B_out,), -1, jnp.int32).at[:B].set(targets.astype(jnp.int32))
    tgt = tgt.reshape(1, B_out)

    scratch_shapes = [pltpu.VMEM((TC, D), jnp.bfloat16)] if use_bf16_mxu else []

    # Explicit VMEM budget (double-buffered blocks) + headroom.
    buf_bytes = (2 * TB * D * 4          # encoded tiles
                 + 2 * TC * D * 4        # class_hvs block
                 + 2 * TC * D * 4        # updated class_hvs block (resident output)
                 + 2 * TB * TC * 4       # scores tile
                 + 2 * TB * 4 + 2 * TC * 4  # targets + inv_c rows
                 + (TC * D * 2 if use_bf16_mxu else 0))
    vmem_limit = min(2 * buf_bytes + (8 << 20), 110 << 20)

    kernel = functools.partial(
        _hd_kernel, batch_size=B, block_b=TB, block_c=TC,
        mask_tail=mask_tail, use_bf16_mxu=use_bf16_mxu)

    scores_pad, hvs_out_pad = pl.pallas_call(
        kernel,
        out_shape=(
            jax.ShapeDtypeStruct((B_out, C_pad), jnp.float32),
            jax.ShapeDtypeStruct((C_pad, D), jnp.float32),
        ),
        grid=(grid_c, grid_b),
        in_specs=[
            pl.BlockSpec((TB, D), lambda c, i: (i, 0)),        # encoded: tiled over batch
            pl.BlockSpec((TC, D), lambda c, i: (c, 0)),        # class_hvs: resident per class block
            pl.BlockSpec((1, TC), lambda c, i: (0, c)),        # inv_c row
            pl.BlockSpec((1, TB), lambda c, i: (0, i)),        # targets: tiled over batch
        ],
        out_specs=(
            pl.BlockSpec((TB, TC), lambda c, i: (i, c)),       # scores: lane-dense tiles
            pl.BlockSpec((TC, D), lambda c, i: (c, 0)),        # updated hvs: resident accumulator
        ),
        scratch_shapes=scratch_shapes,
        input_output_aliases={1: 1},                           # reuse class_hvs HBM buffer
        compiler_params=pltpu.CompilerParams(
            dimension_semantics=("parallel", "arbitrary"),     # class blocks parallel (v7x 2 TCs)
            vmem_limit_bytes=vmem_limit),
    )(enc, hvs, inv_c, tgt)

    return scores_pad[:B, :C], hvs_out_pad[:C, :]


if __name__ == "__main__":
    # Small shapes consistent with the module; B=200 with tb=128 -> 2 batch tiles + tail mask.
    B, C, D = 200, 10, 512
    key = jax.random.PRNGKey(0)
    k_enc, k_hvs, k_tgt = jax.random.split(key, 3)

    encoded = jax.random.normal(k_enc, (B, D), dtype=jnp.float32)
    # Deterministic nonzero init (zeros, as in __init__, would give 0/0 scores).
    class_hvs = 0.01 * jax.random.normal(k_hvs, (C, D), dtype=jnp.float32)
    targets = jax.random.randint(k_tgt, (B,), 0, C, dtype=jnp.int32)

    # Plain-JAX reference (first-call branch of HDClassifier.forward).
    raw = encoded @ class_hvs.T
    ref_scores = raw / (jnp.linalg.norm(encoded, axis=1, keepdims=True)
                        * jnp.linalg.norm(class_hvs, axis=1)[None, :])
    onehot = jax.nn.one_hot(targets, C, dtype=jnp.float32)
    ref_hvs = class_hvs + onehot.T @ encoded

    # Default fast path: bf16 MXU feed for scores, f32 bundling.
    fwd_bf16 = jax.jit(functools.partial(hd_classifier_forward, tb=128, use_bf16_mxu=True))
    scores, new_hvs = fwd_bf16(encoded, class_hvs, targets)
    jax.block_until_ready((scores, new_hvs))
    assert scores.shape == (B, C) and new_hvs.shape == (C, D)
    assert bool(jnp.all(jnp.isfinite(scores))), "non-finite scores"
    assert jnp.allclose(scores, ref_scores, atol=3e-3, rtol=2e-2), "bf16 scores mismatch"
    assert jnp.allclose(new_hvs, ref_hvs, atol=1e-3, rtol=1e-4), "class_hvs update mismatch (bf16 path)"

    # Exact-f32 path (tighter tolerance).
    fwd_f32 = jax.jit(functools.partial(hd_classifier_forward, tb=128, use_bf16_mxu=False))
    scores32, new_hvs32 = fwd_f32(encoded, class_hvs, targets)
    jax.block_until_ready((scores32, new_hvs32))
    assert jnp.allclose(scores32, ref_scores, atol=1e-4, rtol=1e-4), "f32 scores mismatch"
    assert jnp.allclose(new_hvs32, ref_hvs, atol=1e-3, rtol=1e-4), "class_hvs update mismatch (f32 path)"

    print("KERNEL_OK")
</pallas_src>

<mosaic_0001>
module attributes {stable_mosaic.version = 11 : i64} {
  func.func @_hd_kernel(%arg0: i32, %arg1: i32, %arg2: memref<128x512xf32, #tpu.memory_space<vmem>>, %arg3: memref<128x512xf32, #tpu.memory_space<vmem>>, %arg4: memref<1x128xf32, #tpu.memory_space<vmem>>, %arg5: memref<1x128xi32, #tpu.memory_space<vmem>>, %arg6: memref<128x128xf32, #tpu.memory_space<vmem>>, %arg7: memref<128x512xf32, #tpu.memory_space<vmem>>, %arg8: memref<128x512xbf16, #tpu.memory_space<vmem>>) attributes {dimension_semantics = [#tpu.dimension_semantics<parallel>, #tpu.dimension_semantics<arbitrary>], iteration_bounds = array<i64: 1, 2>, scalar_prefetch = 0 : i64, scratch_operands = 1 : i64, tpu.core_type = #tpu.core_type<tc>, window_params = [{transform_indices = @transform_0, window_bounds = array<i64: 128, 512>}, {transform_indices = @transform_1, window_bounds = array<i64: 128, 512>}, {transform_indices = @transform_2, window_bounds = array<i64: 1, 128>}, {transform_indices = @transform_3, window_bounds = array<i64: 1, 128>}, {transform_indices = @transform_4, window_bounds = array<i64: 128, 128>}, {transform_indices = @transform_5, window_bounds = array<i64: 128, 512>}]} {
    %c0 = arith.constant 0 : index
    %c0_0 = arith.constant 0 : index
    %0 = vector.load %arg2[%c0, %c0_0] : memref<128x512xf32, #tpu.memory_space<vmem>>, vector<128x512xf32>
    %c128_i32 = arith.constant 128 : i32
    %1 = arith.muli %arg1, %c128_i32 : i32
    %2 = tpu.iota {dimensions = array<i32: 0>} : vector<128x1xi32>
    %3 = vector.broadcast %1 : i32 to vector<128x1xi32>
    %4 = arith.addi %3, %2 : vector<128x1xi32>
    %c200_i32 = arith.constant 200 : i32
    %5 = vector.broadcast %c200_i32 : i32 to vector<128x1xi32>
    %6 = arith.cmpi slt, %4, %5 : vector<128x1xi32>
    %cst = arith.constant 0.000000e+00 : f32
    %7 = vector.shape_cast %6 : vector<128x1xi1> to vector<128x1xi1>
    %8 = vector.broadcast %7 : vector<128x1xi1> to vector<128x512xi1>
    %9 = vector.broadcast %cst : f32 to vector<128x512xf32>
    %10 = arith.select %8, %0, %9 : vector<128x512xi1>, vector<128x512xf32>
    %11 = arith.mulf %10, %10 : vector<128x512xf32>
    %cst_1 = arith.constant dense<0.000000e+00> : vector<128xf32>
    %12 = vector.multi_reduction <add>, %11, %cst_1 [1] : vector<128x512xf32> to vector<128xf32>
    %13 = vector.shape_cast %12 : vector<128xf32> to vector<128x1xf32>
    %cst_2 = arith.constant 0.000000e+00 : f32
    %14 = vector.broadcast %cst_2 : f32 to vector<128x1xf32>
    %15 = arith.cmpf ogt, %13, %14 : vector<128x1xf32>
    %16 = math.rsqrt %13 : vector<128x1xf32>
    %cst_3 = arith.constant 0.000000e+00 : f32
    %17 = vector.broadcast %cst_3 : f32 to vector<128x1xf32>
    %18 = arith.select %15, %16, %17 : vector<128x1xi1>, vector<128x1xf32>
    %c0_i32 = arith.constant 0 : i32
    %19 = arith.cmpi eq, %arg1, %c0_i32 : i32
    %20 = arith.extui %19 : i1 to i32
    %c0_i32_4 = arith.constant 0 : i32
    %21 = arith.cmpi ne, %20, %c0_i32_4 : i32
    scf.if %21 {
      %c0_22 = arith.constant 0 : index
      %c0_23 = arith.constant 0 : index
      %47 = vector.load %arg3[%c0_22, %c0_23] : memref<128x512xf32, #tpu.memory_space<vmem>>, vector<128x512xf32>
      %48 = arith.truncf %47 : vector<128x512xf32> to vector<128x512xbf16>
      %c0_24 = arith.constant 0 : index
      %c0_25 = arith.constant 0 : index
      %49 = vector.load %arg8[%c0_24, %c0_25] : memref<128x512xbf16, #tpu.memory_space<vmem>>, vector<128x512xbf16>
      tpu.vector_store %arg8[%c0_24, %c0_25], %48 {strides = array<i32>} : memref<128x512xbf16, #tpu.memory_space<vmem>>, vector<128x512xbf16>,
    } else {
    }
    %22 = arith.truncf %10 : vector<128x512xf32> to vector<128x512xbf16>
    %c0_5 = arith.constant 0 : index
    %c0_6 = arith.constant 0 : index
    %23 = vector.load %arg8[%c0_5, %c0_6] : memref<128x512xbf16, #tpu.memory_space<vmem>>, vector<128x512xbf16>
    "tpu.trace_start"() <{level = 10 : i32, message = "bd,cd->bc"}> : () -> ()
    %cst_7 = arith.constant dense<0.000000e+00> : vector<128x128xf32>
    %24 = tpu.matmul %22, %23, %cst_7 {dimension_numbers = #tpu.dot_dimension_numbers<[1], [1], [0], [0], [0, 0, 1, 0], [], []>} : vector<128x512xbf16>, vector<128x512xbf16>, vector<128x128xf32> -> vector<128x128xf32>
    "tpu.trace_stop"() : () -> ()
    %25 = vector.broadcast %18 : vector<128x1xf32> to vector<128x128xf32>
    %26 = arith.mulf %24, %25 : vector<128x128xf32>
    %c0_8 = arith.constant 0 : index
    %c0_9 = arith.constant 0 : index
    %27 = vector.load %arg4[%c0_8, %c0_9] : memref<1x128xf32, #tpu.memory_space<vmem>>, vector<1x128xf32>
    %28 = vector.broadcast %27 : vector<1x128xf32> to vector<128x128xf32>
    %29 = arith.mulf %26, %28 : vector<128x128xf32>
    %c0_10 = arith.constant 0 : index
    %c0_11 = arith.constant 0 : index
    %30 = vector.load %arg6[%c0_10, %c0_11] : memref<128x128xf32, #tpu.memory_space<vmem>>, vector<128x128xf32>
    tpu.vector_store %arg6[%c0_10, %c0_11], %29 {strides = array<i32>} : memref<128x128xf32, #tpu.memory_space<vmem>>, vector<128x128xf32>,
    %c128_i32_12 = arith.constant 128 : i32
    %31 = arith.muli %arg0, %c128_i32_12 : i32
    %32 = tpu.iota {dimensions = array<i32: 0>} : vector<128x128xi32>
    %33 = vector.broadcast %31 : i32 to vector<128x128xi32>
    %34 = arith.addi %33, %32 : vector<128x128xi32>
    %c0_13 = arith.constant 0 : index
    %c0_14 = arith.constant 0 : index
    %35 = vector.load %arg5[%c0_13, %c0_14] : memref<1x128xi32, #tpu.memory_space<vmem>>, vector<1x128xi32>
    %36 = vector.broadcast %35 : vector<1x128xi32> to vector<128x128xi32>
    %37 = arith.cmpi eq, %34, %36 : vector<128x128xi32>
    %38 = arith.extui %37 : vector<128x128xi1> to vector<128x128xi32>
    %39 = arith.sitofp %38 : vector<128x128xi32> to vector<128x128xf32>
    %cst_15 = arith.constant dense<0.000000e+00> : vector<128x512xf32>
    %40 = tpu.matmul %39, %10, %cst_15 {dimension_numbers = #tpu.dot_dimension_numbers<[1], [0], [0], [1], [0, 0, 1, 1], [], []>} : vector<128x128xf32>, vector<128x512xf32>, vector<128x512xf32> -> vector<128x512xf32>
    %c0_i32_16 = arith.constant 0 : i32
    %41 = arith.cmpi eq, %arg1, %c0_i32_16 : i32
    %42 = arith.extui %41 : i1 to i32
    %c0_i32_17 = arith.constant 0 : i32
    %43 = arith.cmpi ne, %42, %c0_i32_17 : i32
    scf.if %43 {
      %c0_22 = arith.constant 0 : index
      %c0_23 = arith.constant 0 : index
      %47 = vector.load %arg3[%c0_22, %c0_23] : memref<128x512xf32, #tpu.memory_space<vmem>>, vector<128x512xf32>
      %c0_24 = arith.constant 0 : index
      %c0_25 = arith.constant 0 : index
      %48 = vector.load %arg7[%c0_24, %c0_25] : memref<128x512xf32, #tpu.memory_space<vmem>>, vector<128x512xf32>
      tpu.vector_store %arg7[%c0_24, %c0_25], %47 {strides = array<i32>} : memref<128x512xf32, #tpu.memory_space<vmem>>, vector<128x512xf32>,
    } else {
    }
    %c0_18 = arith.constant 0 : index
    %c0_19 = arith.constant 0 : index
    %44 = vector.load %arg7[%c0_18, %c0_19] : memref<128x512xf32, #tpu.memory_space<vmem>>, vector<128x512xf32>
    %45 = arith.addf %44, %40 : vector<128x512xf32>
    %c0_20 = arith.constant 0 : index
    %c0_21 = arith.constant 0 : index
    %46 = vector.load %arg7[%c0_20, %c0_21] : memref<128x512xf32, #tpu.memory_space<vmem>>, vector<128x512xf32>
    tpu.vector_store %arg7[%c0_20, %c0_21], %45 {strides = array<i32>} : memref<128x512xf32, #tpu.memory_space<vmem>>, vector<128x512xf32>,
    return
  }
  func.func @transform_0(%arg0: i32, %arg1: i32) -> (i32, i32) {
    %c0_i32 = arith.constant 0 : i32
    %c0_i32_0 = arith.constant 0 : i32
    return %arg1, %c0_i32 : i32, i32
  }
  func.func @transform_1(%arg0: i32, %arg1: i32) -> (i32, i32) {
    %c0_i32 = arith.constant 0 : i32
    %c0_i32_0 = arith.constant 0 : i32
    return %arg0, %c0_i32 : i32, i32
  }
  func.func @transform_2(%arg0: i32, %arg1: i32) -> (i32, i32) {
    %c0_i32 = arith.constant 0 : i32
    %c0_i32_0 = arith.constant 0 : i32
    return %c0_i32, %arg0 : i32, i32
  }
  func.func @transform_3(%arg0: i32, %arg1: i32) -> (i32, i32) {
    %c0_i32 = arith.constant 0 : i32
    %c0_i32_0 = arith.constant 0 : i32
    return %c0_i32, %arg1 : i32, i32
  }
  func.func @transform_4(%arg0: i32, %arg1: i32) -> (i32, i32) {
    %c0_i32 = arith.constant 0 : i32
    return %arg1, %arg0 : i32, i32
  }
  func.func @transform_5(%arg0: i32, %arg1: i32) -> (i32, i32) {
    %c0_i32 = arith.constant 0 : i32
    %c0_i32_0 = arith.constant 0 : i32
    return %arg0, %c0_i32 : i32, i32
  }
}

</mosaic_0001>

<llo_original>
// kernel: hd_classifier_forward.1
$region0: #{hd_classifier_forward.1}
  #allocation0 [shape = 'u32[]', space=smem, size = 0x4, offset = 0x4, fixed_abs, tag = 'smem constant byte address 0x4 - core index']
  #allocation1 [shape = 'u32[144,128]{1,0:T(1,128)}', space=vmem, size = 0x12000, scoped, tag = 'internal scratch']
  #allocation2 [shape = 'bf16[128,512]{1,0:T(16,128)(2,1)}', space=vmem, size = 0x20000, scoped, tag = 'scratch operand']
  %s0 = inlined_call_operand.hbm [shape: f32[200,512], index: 0, kind: input, shape index: {}]
  %s1 = inlined_call_operand.vmem [shape: f32[128,512], index: 1, kind: input, shape index: {}, may-alias: {1,5}]
  %s2 = inlined_call_operand.vmem [shape: f32[1,128], index: 2, kind: input, shape index: {}]
  %s3 = inlined_call_operand.vmem [shape: s32[1,256], index: 3, kind: input, shape index: {}]
  %s4 = inlined_call_operand.vmem [shape: f32[256,128], index: 4, kind: output, shape index: {0}]
  %s5 = inlined_call_operand.vmem [shape: f32[128,512], index: 5, kind: output, shape index: {1}, may-alias: {1,5}]
  %6 = xla_tuple %s4, %s5
  %s7 = sld [smem:[#allocation0]]
  $region69: #{hd_classifier_forward.1} parent=0
    _
  %s9 = ssub.s32 1, %s7
  %s10 = scalar_select 0, %s9, %s7
  $region1: #{hd_classifier_forward.1} parent=0
    #allocation3 [shape = 'u8[524288]{0}', space=vmem, size = 0x80000, scoped, tag = 'input window, operand 0']
    #allocation4 [shape = 's32[2]{0}', space=sflag, size = 0x8, scoped, tag = 'scoped memory for hd_classifier_forward.1']
    %11 = vsyncpa [#allocation4], 0
    %s12 = scalar_lea.sflag [#allocation4], 1
    %13 = vsyncpa %s12, 0
    loop: start=0, step=1, limit=4
    $region2: #{hd_classifier_forward.1} parent=1 // loop_pre_header
      _
    $region3: #{hd_classifier_forward.1} parent=1 // loop_header
      %s15 = sphi 0, %s19
      %p16 = scmp.ge.s32.totalorder %s15, 4
      %s22 = sphi 0, %s34
      %s23 = sphi 0, %s30
      %s24 = sphi 0, %s22
      %s25 = sphi 0, %s23
      %s26 = sphi 0, %s24
      %s27 = sphi 0, %s25
      %s37 = sphi 0, %s39
      %s40 = sphi 0, %s37
      %s41 = sphi 0, %s40
      %s57 = sphi 0, %s41
      %s63 = sphi 0, %s65
      %s66 = sphi 0, %s63
      %s67 = sphi 0, %s66
      %s83 = sphi 0, %s67
      %s89 = sphi 0, %s91
      %s92 = sphi 0, %s89
      %s93 = sphi 0, %s92
      %s109 = sphi 0, %s93
      %s115 = sphi 0, %s117
      %s118 = sphi 0, %s115
      %s119 = sphi 0, %s118
      %s135 = sphi 0, %s119
      %s143 = sphi 0, %s145
      %s146 = sphi 0, %s143
      %s147 = sphi 0, %s146
      %s163 = sphi 0, %s147
      %s169 = sphi 0, %s171
      %s172 = sphi 0, %s169
      %s173 = sphi 0, %s172
      %s189 = sphi 0, %s173
    $region4: #{hd_classifier_forward.1} parent=1 // loop_header_branch
      %18 = sbr.rel (%p16) target = $region8
    $region5: #{hd_classifier_forward.1} parent=1 // loop_body
      %s20 = ssub.s32 %s15, 1
      %s21 = ssub.s32 %s15, 2
      %s28 = sadd.s32 1, %s23
      %p29 = scmp.ge.s32.totalorder %s28, 2
      %s30 = scalar_select %p29, 0, %s28
      %s31 = sadd.s32 1, %s22
      %s32 = scalar_select %p29, %s31, %s22
      %p33 = scmp.ge.s32.totalorder %s32, 1
      %s34 = scalar_select %p33, 0, %s32
      %s35 = ssub.s32 %s23, %s30
      %p36 = scmp.eq.s32.totalorder %s35, 0
      %s38 = sadd.s32 %s37, 1
      %s39 = scalar_select %p36, %s37, %s38
      %p42 = pneg %p36
      %p43 = scmp.eq.s32.totalorder %s15, 1
      %p44 = por %p42, %p43
      %p45 = scmp.ne.s32.totalorder %s37, %s40
      %p46 = scmp.eq.s32.totalorder %s15, 0
      %p47 = por %p45, %p46
      %p48 = scmp.ne.s32.totalorder %s37, %s40
      %p49 = scmp.eq.s32.totalorder %s20, 1
      %p50 = por %p48, %p49
      %p51 = scmp.ne.s32.totalorder %s40, %s41
      %p52 = scmp.eq.s32.totalorder %s20, 0
      %p53 = por %p51, %p52
      %p54 = scmp.ne.s32.totalorder %s40, %s41
      %p55 = scmp.eq.s32.totalorder %s21, 1
      %p56 = por %p54, %p55
      %p58 = scmp.ne.s32.totalorder %s41, %s57
      %p59 = scmp.eq.s32.totalorder %s21, 0
      %p60 = por %p58, %p59
      %s61 = ssub.s32 %s22, %s34
      %p62 = scmp.eq.s32.totalorder %s61, 0
      %s64 = sadd.s32 %s63, 1
      %s65 = scalar_select %p62, %s63, %s64
      %p68 = pneg %p62
      %p69 = scmp.eq.s32.totalorder %s15, 1
      %p70 = por %p68, %p69
      %p71 = scmp.ne.s32.totalorder %s63, %s66
      %p72 = scmp.eq.s32.totalorder %s15, 0
      %p73 = por %p71, %p72
      %p74 = scmp.ne.s32.totalorder %s63, %s66
      %p75 = scmp.eq.s32.totalorder %s20, 1
      %p76 = por %p74, %p75
      %p77 = scmp.ne.s32.totalorder %s66, %s67
      %p78 = scmp.eq.s32.totalorder %s20, 0
      %p79 = por %p77, %p78
      %p80 = scmp.ne.s32.totalorder %s66, %s67
      %p81 = scmp.eq.s32.totalorder %s21, 1
      %p82 = por %p80, %p81
      %p84 = scmp.ne.s32.totalorder %s67, %s83
      %p85 = scmp.eq.s32.totalorder %s21, 0
      %p86 = por %p84, %p85
      %s87 = ssub.s32 %s22, %s34
      %p88 = scmp.eq.s32.totalorder %s87, 0
      %s90 = sadd.s32 %s89, 1
      %s91 = scalar_select %p88, %s89, %s90
      %p94 = pneg %p88
      %p95 = scmp.eq.s32.totalorder %s15, 1
      %p96 = por %p94, %p95
      %p97 = scmp.ne.s32.totalorder %s89, %s92
      %p98 = scmp.eq.s32.totalorder %s15, 0
      %p99 = por %p97, %p98
      %p100 = scmp.ne.s32.totalorder %s89, %s92
      %p101 = scmp.eq.s32.totalorder %s20, 1
      %p102 = por %p100, %p101
      %p103 = scmp.ne.s32.totalorder %s92, %s93
      %p104 = scmp.eq.s32.totalorder %s20, 0
      %p105 = por %p103, %p104
      %p106 = scmp.ne.s32.totalorder %s92, %s93
      %p107 = scmp.eq.s32.totalorder %s21, 1
      %p108 = por %p106, %p107
      %p110 = scmp.ne.s32.totalorder %s93, %s109
      %p111 = scmp.eq.s32.totalorder %s21, 0
      %p112 = por %p110, %p111
      %s113 = ssub.s32 %s23, %s30
      %p114 = scmp.eq.s32.totalorder %s113, 0
      %s116 = sadd.s32 %s115, 1
      %s117 = scalar_select %p114, %s115, %s116
      %p120 = pneg %p114
      %p121 = scmp.eq.s32.totalorder %s15, 1
      %p122 = por %p120, %p121
      %p123 = scmp.ne.s32.totalorder %s115, %s118
      %p124 = scmp.eq.s32.totalorder %s15, 0
      %p125 = por %p123, %p124
      %p126 = scmp.ne.s32.totalorder %s115, %s118
      %p127 = scmp.eq.s32.totalorder %s20, 1
      %p128 = por %p126, %p127
      %p129 = scmp.ne.s32.totalorder %s118, %s119
      %p130 = scmp.eq.s32.totalorder %s20, 0
      %p131 = por %p129, %p130
      %p132 = scmp.ne.s32.totalorder %s118, %s119
      %p133 = scmp.eq.s32.totalorder %s21, 1
      %p134 = por %p132, %p133
      %p136 = scmp.ne.s32.totalorder %s119, %s135
      %p137 = scmp.eq.s32.totalorder %s21, 0
      %p138 = por %p136, %p137
      %s139 = ssub.s32 %s23, %s30
      %s140 = ssub.s32 %s22, %s34
      %s141 = sor.u32 %s139, %s140
      %p142 = scmp.eq.s32.totalorder %s141, 0
      %s144 = sadd.s32 %s143, 1
      %s145 = scalar_select %p142, %s143, %s144
      %p148 = pneg %p142
      %p149 = scmp.eq.s32.totalorder %s15, 1
      %p150 = por %p148, %p149
      %p151 = scmp.ne.s32.totalorder %s143, %s146
      %p152 = scmp.eq.s32.totalorder %s15, 0
      %p153 = por %p151, %p152
      %p154 = scmp.ne.s32.totalorder %s143, %s146
      %p155 = scmp.eq.s32.totalorder %s20, 1
      %p156 = por %p154, %p155
      %p157 = scmp.ne.s32.totalorder %s146, %s147
      %p158 = scmp.eq.s32.totalorder %s20, 0
      %p159 = por %p157, %p158
      %p160 = scmp.ne.s32.totalorder %s146, %s147
      %p161 = scmp.eq.s32.totalorder %s21, 1
      %p162 = por %p160, %p161
      %p164 = scmp.ne.s32.totalorder %s147, %s163
      %p165 = scmp.eq.s32.totalorder %s21, 0
      %p166 = por %p164, %p165
      %s167 = ssub.s32 %s22, %s34
      %p168 = scmp.eq.s32.totalorder %s167, 0
      %s170 = sadd.s32 %s169, 1
      %s171 = scalar_select %p168, %s169, %s170
      %p174 = pneg %p168
      %p175 = scmp.eq.s32.totalorder %s15, 1
      %p176 = por %p174, %p175
      %p177 = scmp.ne.s32.totalorder %s169, %s172
      %p178 = scmp.eq.s32.totalorder %s15, 0
      %p179 = por %p177, %p178
      %p180 = scmp.ne.s32.totalorder %s169, %s172
      %p181 = scmp.eq.s32.totalorder %s20, 1
      %p182 = por %p180, %p181
      %p183 = scmp.ne.s32.totalorder %s172, %s173
      %p184 = scmp.eq.s32.totalorder %s20, 0
      %p185 = por %p183, %p184
      %p186 = scmp.ne.s32.totalorder %s172, %s173
      %p187 = scmp.eq.s32.totalorder %s21, 1
      %p188 = por %p186, %p187
      %p190 = scmp.ne.s32.totalorder %s173, %s189
      %p191 = scmp.eq.s32.totalorder %s21, 0
      %p192 = por %p190, %p191
      %p193 = scmp.le.s32.totalorder 1, %s15
      %p194 = scmp.lt.s32.totalorder %s15, 3
      %p195 = pnand %p193, %p194
      %p196 = pneg %p195
      // Predicated region
      $region9: #{hd_classifier_forward.1} parent=5 // pred_check
        _
      $region10: #{hd_classifier_forward.1} parent=5 // pred_check_branch
        %198 = sbr.rel (%p195) target = $region12
      $region11: #{hd_classifier_forward.1} parent=5 // pred_region
        %s199 = ssub.s32 %s15, 1
        // Predicated region
        $region13: #{hd_classifier_forward.1} parent=11 // pred_check
          %p200 = pneg %p79
        $region14: #{hd_classifier_forward.1} parent=11 // pred_check_branch
          %202 = sbr.rel (%p200) target = $region16
        $region15: #{hd_classifier_forward.1} parent=11 // pred_region
          %s203 = smul.u32 16, %s24
          %p204 = scmp.lt.s32.totalorder %s203, 15
          %s205 = scalar_select %p204, %s203, 15
          %s206 = smul.addr %s205, 4
          %s207 = smul.addr %s206, 8
          %s208 = scalar_lea.vmem %s1, %s207
          %s209 = smul.u32 16, %s24
        $region16: #{hd_classifier_forward.1} parent=11 // pred_fallthru
          _
        // Predicated region
        $region17: #{hd_classifier_forward.1} parent=11 // pred_check
          %p210 = pneg %p105
        $region18: #{hd_classifier_forward.1} parent=11 // pred_check_branch
          %212 = sbr.rel (%p210) target = $region20
        $region19: #{hd_classifier_forward.1} parent=11 // pred_region
          %p213 = scmp.lt.s32.totalorder %s24, 0
          %s214 = scalar_select %p213, %s24, 0
          %s215 = scalar_lea.vmem %s2, %s214
        $region20: #{hd_classifier_forward.1} parent=11 // pred_fallthru
          _
      $region12: #{hd_classifier_forward.1} parent=5 // pred_fallthru
        _
      %p216 = scmp.lt.s32.totalorder %s15, 2
      // Predicated region
      $region21: #{hd_classifier_forward.1} parent=5 // pred_check
        %p217 = pneg %p216
      $region22: #{hd_classifier_forward.1} parent=5 // pred_check_branch
        %219 = sbr.rel (%p217) target = $region24
      $region23: #{hd_classifier_forward.1} parent=5 // pred_region
        // Predicated region
        $region25: #{hd_classifier_forward.1} parent=23 // pred_check
          %p220 = pneg %p47
        $region26: #{hd_classifier_forward.1} parent=23 // pred_check_branch
          %222 = sbr.rel (%p220) target = $region28
        $region27: #{hd_classifier_forward.1} parent=23 // pred_region
          %s223 = sand.u32 %s37, 1
          %s224 = scalar_lea.sflag [#allocation4], %s223
          %s225 = sand.u32 %s37, 1
          %s226 = smul.addr %s225, 512
          %s227 = scalar_lea.vmem [#allocation3], %s226
          %s228 = smul.u32 16, %s23
          %s229 = ssub.s32 25, %s228
          %p230 = scmp.lt.s32.totalorder %s229, 16
          %s231 = scalar_select %p230, %s229, 16
          %s232 = smul.u32 128, %s231
          %s233 = smul.u32 %s232, 4
          %s235 = ssub.s32 8192, %s233
          %236 = vsyncadd %s224, %s235
          %p237 = scmp.ne.s32.totalorder 0, %s233
          %s238 = smul.addr %s228, 4
          %s239 = smul.addr %s238, 128
          %s240 = scalar_lea.hbm %s0, %s239
          %s241 = smul.u32 32, %s231
          %s242 = sshll.u32 %s227, 4
          %s243 = int_to_ptr.vmem [resolvable:$true] %s242
          %s244 = sshll.u32 %s241, 4
          %248 = dma.hbm_to_vmem [thread:$0]  (%p237), %s240, %s244, %s243, %s224, 512, 512, 32
        $region28: #{hd_classifier_forward.1} parent=23 // pred_fallthru
          _
        // Predicated region
        $region29: #{hd_classifier_forward.1} parent=23 // pred_check
          %p249 = pneg %p125
        $region30: #{hd_classifier_forward.1} parent=23 // pred_check_branch
          %251 = sbr.rel (%p249) target = $region32
        $region31: #{hd_classifier_forward.1} parent=23 // pred_region
          %p252 = scmp.lt.s32.totalorder %s23, 1
          %s253 = scalar_select %p252, %s23, 1
          %s254 = scalar_lea.vmem %s3, %s253
        $region32: #{hd_classifier_forward.1} parent=23 // pred_fallthru
          _
      $region24: #{hd_classifier_forward.1} parent=5 // pred_fallthru
        _
      %p255 = scmp.le.s32.totalorder 1, %s15
      %p256 = scmp.lt.s32.totalorder %s15, 3
      %p257 = pnand %p255, %p256
      %p258 = pneg %p257
      // Predicated region
      $region33: #{hd_classifier_forward.1} parent=5 // pred_check
        _
      $region34: #{hd_classifier_forward.1} parent=5 // pred_check_branch
        %260 = sbr.rel (%p257) target = $region36
      $region35: #{hd_classifier_forward.1} parent=5 // pred_region
        %s261 = ssub.s32 %s15, 1
        %s262 = sand.u32 %s40, 1
        %s263 = scalar_lea.sflag [#allocation4], %s262
        %s264 = sand.u32 %s40, 1
        %s265 = smul.addr %s264, 512
        %s266 = scalar_lea.vmem [#allocation3], %s265
        // Predicated region
        $region37: #{hd_classifier_forward.1} parent=35 // pred_check
          %p267 = pneg %p53
        $region38: #{hd_classifier_forward.1} parent=35 // pred_check_branch
          %269 = sbr.rel (%p267) target = $region40
        $region39: #{hd_classifier_forward.1} parent=35 // pred_region
          %270 = dma.done %s263, 8192
        $region40: #{hd_classifier_forward.1} parent=35 // pred_fallthru
          _
        %s271 = sand.u32 %s40, 1
        %s272 = scalar_lea.sflag [#allocation4], %s271
        %s273 = sand.u32 %s40, 1
        %s274 = smul.addr %s273, 512
        %s275 = scalar_lea.vmem [#allocation3], %s274
        %p276 = pneg %p53
        %p277 = pneg %p50
        %s278 = smul.u32 16, %s24
        %p279 = scmp.lt.s32.totalorder %s278, 15
        %s280 = scalar_select %p279, %s278, 15
        %s281 = smul.addr %s280, 4
        %s282 = smul.addr %s281, 8
        %s283 = scalar_lea.vmem %s1, %s282
        %p284 = pneg %p79
        %p285 = pneg %p76
        %p286 = scmp.lt.s32.totalorder %s24, 0
        %s287 = scalar_select %p286, %s24, 0
        %s288 = scalar_lea.vmem %s2, %s287
        %p289 = pneg %p105
        %p290 = pneg %p102
        %p291 = scmp.lt.s32.totalorder %s25, 1
        %s292 = scalar_select %p291, %s25, 1
        %s293 = scalar_lea.vmem %s3, %s292
        %p294 = pneg %p131
        %p295 = pneg %p128
        %p296 = pneg %p159
        %p297 = pneg %p156
        %s298 = smul.u32 16, %s25
        %p299 = scmp.lt.s32.totalorder %s298, 31
        %s300 = scalar_select %p299, %s298, 31
        %p301 = scmp.lt.s32.totalorder %s24, 0
        %s302 = scalar_select %p301, %s24, 0
        %s303 = sadd.s32 %s302, %s300
        %s304 = smul.addr %s303, 8
        %s305 = scalar_lea.vmem %s4, %s304
        %p306 = pneg %p185
        %p307 = pneg %p182
        %s308 = smul.u32 16, %s24
        %p309 = scmp.lt.s32.totalorder %s308, 15
        %s310 = scalar_select %p309, %s308, 15
        %s311 = smul.addr %s310, 4
        %s312 = smul.addr %s311, 8
        %s313 = scalar_lea.vmem %s5, %s312
        %s314 = smul.u32 16, %s25
        %s315 = ssub.s32 25, %s314
        %p316 = scmp.lt.s32.totalorder %s315, 16
        %s317 = scalar_select %p316, %s315, 16
        %s318 = smul.u32 128, %s317
        %s319 = smul.u32 %s318, 4
        %s320 = smul.u32 16, %s24
        %p321 = scmp.lt.s32.totalorder %s320, 15
        %s322 = scalar_select %p321, %s320, 15
        %s323 = smul.addr %s322, 4
        %s324 = smul.addr %s323, 8
        %s325 = scalar_lea.vmem %s1, %s324
        %s326 = smul.u32 16, %s24
        %p327 = scmp.lt.s32.totalorder %s24, 0
        %s328 = scalar_select %p327, %s24, 0
        %s329 = scalar_lea.vmem %s2, %s328
        %p330 = scmp.lt.s32.totalorder %s25, 1
        %s331 = scalar_select %p330, %s25, 1
        %s332 = scalar_lea.vmem %s3, %s331
        %s333 = smul.u32 16, %s25
        %p334 = scmp.lt.s32.totalorder %s333, 31
        %s335 = scalar_select %p334, %s333, 31
        %p336 = scmp.lt.s32.totalorder %s24, 0
        %s337 = scalar_select %p336, %s24, 0
        %s338 = sadd.s32 %s337, %s335
        %s339 = smul.addr %s338, 8
        %s340 = scalar_lea.vmem %s4, %s339
        %s341 = smul.u32 16, %s25
        %s342 = smul.u32 16, %s24
        %p343 = scmp.lt.s32.totalorder %s342, 15
        %s344 = scalar_select %p343, %s342, 15
        %s345 = smul.addr %s344, 4
        %s346 = smul.addr %s345, 8
        %s347 = scalar_lea.vmem %s5, %s346
        %s348 = smul.u32 16, %s24
        %v350 = vld [vmem:[%s266] sm:$0xff]
        %v351 = vld [vmem:[%s266 + $0x8] sm:$0xff]
        %v352 = vld [vmem:[%s266 + $0x10] sm:$0xff]
        %v353 = vld [vmem:[%s266 + $0x18] sm:$0xff]
        %v354 = vld [vmem:[%s266 + $0x20] sm:$0xff]
        %v355 = vld [vmem:[%s266 + $0x28] sm:$0xff]
        %v356 = vld [vmem:[%s266 + $0x30] sm:$0xff]
        %v357 = vld [vmem:[%s266 + $0x38] sm:$0xff]
        %v358 = vld [vmem:[%s266 + $0x40] sm:$0xff]
        %v359 = vld [vmem:[%s266 + $0x48] sm:$0xff]
        %v360 = vld [vmem:[%s266 + $0x50] sm:$0xff]
        %v361 = vld [vmem:[%s266 + $0x58] sm:$0xff]
        %v362 = vld [vmem:[%s266 + $0x60] sm:$0xff]
        %v363 = vld [vmem:[%s266 + $0x68] sm:$0xff]
        %v364 = vld [vmem:[%s266 + $0x70] sm:$0xff]
        %v365 = vld [vmem:[%s266 + $0x78] sm:$0xff]
        %v366 = vld [vmem:[%s266 + $0x80] sm:$0xff]
        %v367 = vld [vmem:[%s266 + $0x88] sm:$0xff]
        %v368 = vld [vmem:[%s266 + $0x90] sm:$0xff]
        %v369 = vld [vmem:[%s266 + $0x98] sm:$0xff]
        %v370 = vld [vmem:[%s266 + $0xa0] sm:$0xff]
        %v371 = vld [vmem:[%s266 + $0xa8] sm:$0xff]
        %v372 = vld [vmem:[%s266 + $0xb0] sm:$0xff]
        %v373 = vld [vmem:[%s266 + $0xb8] sm:$0xff]
        %v374 = vld [vmem:[%s266 + $0xc0] sm:$0xff]
        %v375 = vld [vmem:[%s266 + $0xc8] sm:$0xff]
        %v376 = vld [vmem:[%s266 + $0xd0] sm:$0xff]
        %v377 = vld [vmem:[%s266 + $0xd8] sm:$0xff]
        %v378 = vld [vmem:[%s266 + $0xe0] sm:$0xff]
        %v379 = vld [vmem:[%s266 + $0xe8] sm:$0xff]
        %v380 = vld [vmem:[%s266 + $0xf0] sm:$0xff]
        %v381 = vld [vmem:[%s266 + $0xf8] sm:$0xff]
        %v382 = vld [vmem:[%s266 + $0x100] sm:$0xff]
        %v383 = vld [vmem:[%s266 + $0x108] sm:$0xff]
        %v384 = vld [vmem:[%s266 + $0x110] sm:$0xff]
        %v385 = vld [vmem:[%s266 + $0x118] sm:$0xff]
        %v386 = vld [vmem:[%s266 + $0x120] sm:$0xff]
        %v387 = vld [vmem:[%s266 + $0x128] sm:$0xff]
        %v388 = vld [vmem:[%s266 + $0x130] sm:$0xff]
        %v389 = vld [vmem:[%s266 + $0x138] sm:$0xff]
        %v390 = vld [vmem:[%s266 + $0x140] sm:$0xff]
        %v391 = vld [vmem:[%s266 + $0x148] sm:$0xff]
        %v392 = vld [vmem:[%s266 + $0x150] sm:$0xff]
        %v393 = vld [vmem:[%s266 + $0x158] sm:$0xff]
        %v394 = vld [vmem:[%s266 + $0x160] sm:$0xff]
        %v395 = vld [vmem:[%s266 + $0x168] sm:$0xff]
        %v396 = vld [vmem:[%s266 + $0x170] sm:$0xff]
        %v397 = vld [vmem:[%s266 + $0x178] sm:$0xff]
        %v398 = vld [vmem:[%s266 + $0x180] sm:$0xff]
        %v399 = vld [vmem:[%s266 + $0x188] sm:$0xff]
        %v400 = vld [vmem:[%s266 + $0x190] sm:$0xff]
        %v401 = vld [vmem:[%s266 + $0x198] sm:$0xff]
        %v402 = vld [vmem:[%s266 + $0x1a0] sm:$0xff]
        %v403 = vld [vmem:[%s266 + $0x1a8] sm:$0xff]
        %v404 = vld [vmem:[%s266 + $0x1b0] sm:$0xff]
        %v405 = vld [vmem:[%s266 + $0x1b8] sm:$0xff]
        %v406 = vld [vmem:[%s266 + $0x1c0] sm:$0xff]
        %v407 = vld [vmem:[%s266 + $0x1c8] sm:$0xff]
        %v408 = vld [vmem:[%s266 + $0x1d0] sm:$0xff]
        %v409 = vld [vmem:[%s266 + $0x1d8] sm:$0xff]
        %v410 = vld [vmem:[%s266 + $0x1e0] sm:$0xff]
        %v411 = vld [vmem:[%s266 + $0x1e8] sm:$0xff]
        %v412 = vld [vmem:[%s266 + $0x1f0] sm:$0xff]
        %v413 = vld [vmem:[%s266 + $0x1f8] sm:$0xff]
        %s414 = smul.u32 %s25, 128
        %v415 = vlaneseq
        %v416 = vshrl.u32 %v415, 7
        %v417 = vadd.s32 %v416, 8
        %v418 = vadd.s32 %v416, 16
        %v419 = vadd.s32 %v416, 24
        %v420 = vadd.s32 %v416, 32
        %v421 = vadd.s32 %v416, 40
        %v422 = vadd.s32 %v416, 48
        %v423 = vadd.s32 %v416, 56
        %v424 = vadd.s32 %v416, 64
        %v425 = vadd.s32 %v416, 72
        %v426 = vadd.s32 %v416, 80
        %v427 = vadd.s32 %v416, 88
        %v428 = vadd.s32 %v416, 96
        %v429 = vadd.s32 %v416, 104
        %v430 = vadd.s32 %v416, 112
        %v431 = vadd.s32 %v416, 120
        %v432 = vstv %s414
        %v433 = vadd.s32 %v432, %v416
        %v434 = vadd.s32 %v432, %v417
        %v435 = vadd.s32 %v432, %v418
        %v436 = vadd.s32 %v432, %v419
        %v437 = vadd.s32 %v432, %v420
        %v438 = vadd.s32 %v432, %v421
        %v439 = vadd.s32 %v432, %v422
        %v440 = vadd.s32 %v432, %v423
        %v441 = vadd.s32 %v432, %v424
        %v442 = vadd.s32 %v432, %v425
        %v443 = vadd.s32 %v432, %v426
        %v444 = vadd.s32 %v432, %v427
        %v445 = vadd.s32 %v432, %v428
        %v446 = vadd.s32 %v432, %v429
        %v447 = vadd.s32 %v432, %v430
        %v448 = vadd.s32 %v432, %v431
        %vm449 = vcmp.lt.s32.totalorder %v433, 200
        %vm450 = vcmp.lt.s32.totalorder %v434, 200
        %vm451 = vcmp.lt.s32.totalorder %v435, 200
        %vm452 = vcmp.lt.s32.totalorder %v436, 200
        %vm453 = vcmp.lt.s32.totalorder %v437, 200
        %vm454 = vcmp.lt.s32.totalorder %v438, 200
        %vm455 = vcmp.lt.s32.totalorder %v439, 200
        %vm456 = vcmp.lt.s32.totalorder %v440, 200
        %vm457 = vcmp.lt.s32.totalorder %v441, 200
        %vm458 = vcmp.lt.s32.totalorder %v442, 200
        %vm459 = vcmp.lt.s32.totalorder %v443, 200
        %vm460 = vcmp.lt.s32.totalorder %v444, 200
        %vm461 = vcmp.lt.s32.totalorder %v445, 200
        %vm462 = vcmp.lt.s32.totalorder %v446, 200
        %vm463 = vcmp.lt.s32.totalorder %v447, 200
        %vm464 = vcmp.lt.s32.totalorder %v448, 200
        %v465 = vsel %vm449, 1, 0
        %v466 = vsel %vm450, 1, 0
        %v467 = vsel %vm451, 1, 0
        %v468 = vsel %vm452, 1, 0
        %v469 = vsel %vm453, 1, 0
        %v470 = vsel %vm454, 1, 0
        %v471 = vsel %vm455, 1, 0
        %v472 = vsel %vm456, 1, 0
        %v473 = vsel %vm457, 1, 0
        %v474 = vsel %vm458, 1, 0
        %v475 = vsel %vm459, 1, 0
        %v476 = vsel %vm460, 1, 0
        %v477 = vsel %vm461, 1, 0
        %v478 = vsel %vm462, 1, 0
        %v479 = vsel %vm463, 1, 0
        %v480 = vsel %vm464, 1, 0
        %vm481 = vcmp.eq.s32.totalorder %v465, 1
        %vm482 = vcmp.eq.s32.totalorder %v466, 1
        %vm483 = vcmp.eq.s32.totalorder %v467, 1
        %vm484 = vcmp.eq.s32.totalorder %v468, 1
        %vm485 = vcmp.eq.s32.totalorder %v469, 1
        %vm486 = vcmp.eq.s32.totalorder %v470, 1
        %vm487 = vcmp.eq.s32.totalorder %v471, 1
        %vm488 = vcmp.eq.s32.totalorder %v472, 1
        %vm489 = vcmp.eq.s32.totalorder %v473, 1
        %vm490 = vcmp.eq.s32.totalorder %v474, 1
        %vm491 = vcmp.eq.s32.totalorder %v475, 1
        %vm492 = vcmp.eq.s32.totalorder %v476, 1
        %vm493 = vcmp.eq.s32.totalorder %v477, 1
        %vm494 = vcmp.eq.s32.totalorder %v478, 1
        %vm495 = vcmp.eq.s32.totalorder %v479, 1
        %vm496 = vcmp.eq.s32.totalorder %v480, 1
        %v497 = vsel %vm481, %v350, 0.0
        %v498 = vsel %vm481, %v351, 0.0
        %v499 = vsel %vm481, %v352, 0.0
        %v500 = vsel %vm481, %v353, 0.0
        %v501 = vsel %vm482, %v354, 0.0
        %v502 = vsel %vm482, %v355, 0.0
        %v503 = vsel %vm482, %v356, 0.0
        %v504 = vsel %vm482, %v357, 0.0
        %v505 = vsel %vm483, %v358, 0.0
        %v506 = vsel %vm483, %v359, 0.0
        %v507 = vsel %vm483, %v360, 0.0
        %v508 = vsel %vm483, %v361, 0.0
        %v509 = vsel %vm484, %v362, 0.0
        %v510 = vsel %vm484, %v363, 0.0
        %v511 = vsel %vm484, %v364, 0.0
        %v512 = vsel %vm484, %v365, 0.0
        %v513 = vsel %vm485, %v366, 0.0
        %v514 = vsel %vm485, %v367, 0.0
        %v515 = vsel %vm485, %v368, 0.0
        %v516 = vsel %vm485, %v369, 0.0
        %v517 = vsel %vm486, %v370, 0.0
        %v518 = vsel %vm486, %v371, 0.0
        %v519 = vsel %vm486, %v372, 0.0
        %v520 = vsel %vm486, %v373, 0.0
        %v521 = vsel %vm487, %v374, 0.0
        %v522 = vsel %vm487, %v375, 0.0
        %v523 = vsel %vm487, %v376, 0.0
        %v524 = vsel %vm487, %v377, 0.0
        %v525 = vsel %vm488, %v378, 0.0
        %v526 = vsel %vm488, %v379, 0.0
        %v527 = vsel %vm488, %v380, 0.0
        %v528 = vsel %vm488, %v381, 0.0
        %v529 = vsel %vm489, %v382, 0.0
        %v530 = vsel %vm489, %v383, 0.0
        %v531 = vsel %vm489, %v384, 0.0
        %v532 = vsel %vm489, %v385, 0.0
        %v533 = vsel %vm490, %v386, 0.0
        %v534 = vsel %vm490, %v387, 0.0
        %v535 = vsel %vm490, %v388, 0.0
        %v536 = vsel %vm490, %v389, 0.0
        %v537 = vsel %vm491, %v390, 0.0
        %v538 = vsel %vm491, %v391, 0.0
        %v539 = vsel %vm491, %v392, 0.0
        %v540 = vsel %vm491, %v393, 0.0
        %v541 = vsel %vm492, %v394, 0.0
        %v542 = vsel %vm492, %v395, 0.0
        %v543 = vsel %vm492, %v396, 0.0
        %v544 = vsel %vm492, %v397, 0.0
        %v545 = vsel %vm493, %v398, 0.0
        %v546 = vsel %vm493, %v399, 0.0
        %v547 = vsel %vm493, %v400, 0.0
        %v548 = vsel %vm493, %v401, 0.0
        %v549 = vsel %vm494, %v402, 0.0
        %v550 = vsel %vm494, %v403, 0.0
        %v551 = vsel %vm494, %v404, 0.0
        %v552 = vsel %vm494, %v405, 0.0
        %v553 = vsel %vm495, %v406, 0.0
        %v554 = vsel %vm495, %v407, 0.0
        %v555 = vsel %vm495, %v408, 0.0
        %v556 = vsel %vm495, %v409, 0.0
        %v557 = vsel %vm496, %v410, 0.0
        %v558 = vsel %vm496, %v411, 0.0
        %v559 = vsel %vm496, %v412, 0.0
        %v560 = vsel %vm496, %v413, 0.0
        %v561 = vmul.f32 %v497, %v497
        %v562 = vmul.f32 %v498, %v498
        %v563 = vmul.f32 %v499, %v499
        %v564 = vmul.f32 %v500, %v500
        %v565 = vmul.f32 %v501, %v501
        %v566 = vmul.f32 %v502, %v502
        %v567 = vmul.f32 %v503, %v503
        %v568 = vmul.f32 %v504, %v504
        %v569 = vmul.f32 %v505, %v505
        %v570 = vmul.f32 %v506, %v506
        %v571 = vmul.f32 %v507, %v507
        %v572 = vmul.f32 %v508, %v508
        %v573 = vmul.f32 %v509, %v509
        %v574 = vmul.f32 %v510, %v510
        %v575 = vmul.f32 %v511, %v511
        %v576 = vmul.f32 %v512, %v512
        %v577 = vmul.f32 %v513, %v513
        %v578 = vmul.f32 %v514, %v514
        %v579 = vmul.f32 %v515, %v515
        %v580 = vmul.f32 %v516, %v516
        %v581 = vmul.f32 %v517, %v517
        %v582 = vmul.f32 %v518, %v518
        %v583 = vmul.f32 %v519, %v519
        %v584 = vmul.f32 %v520, %v520
        %v585 = vmul.f32 %v521, %v521
        %v586 = vmul.f32 %v522, %v522
        %v587 = vmul.f32 %v523, %v523
        %v588 = vmul.f32 %v524, %v524
        %v589 = vmul.f32 %v525, %v525
        %v590 = vmul.f32 %v526, %v526
        %v591 = vmul.f32 %v527, %v527
        %v592 = vmul.f32 %v528, %v528
        %v593 = vmul.f32 %v529, %v529
        %v594 = vmul.f32 %v530, %v530
        %v595 = vmul.f32 %v531, %v531
        %v596 = vmul.f32 %v532, %v532
        %v597 = vmul.f32 %v533, %v533
        %v598 = vmul.f32 %v534, %v534
        %v599 = vmul.f32 %v535, %v535
        %v600 = vmul.f32 %v536, %v536
        %v601 = vmul.f32 %v537, %v537
        %v602 = vmul.f32 %v538, %v538
        %v603 = vmul.f32 %v539, %v539
        %v604 = vmul.f32 %v540, %v540
        %v605 = vmul.f32 %v541, %v541
        %v606 = vmul.f32 %v542, %v542
        %v607 = vmul.f32 %v543, %v543
        %v608 = vmul.f32 %v544, %v544
        %v609 = vmul.f32 %v545, %v545
        %v610 = vmul.f32 %v546, %v546
        %v611 = vmul.f32 %v547, %v547
        %v612 = vmul.f32 %v548, %v548
        %v613 = vmul.f32 %v549, %v549
        %v614 = vmul.f32 %v550, %v550
        %v615 = vmul.f32 %v551, %v551
        %v616 = vmul.f32 %v552, %v552
        %v617 = vmul.f32 %v553, %v553
        %v618 = vmul.f32 %v554, %v554
        %v619 = vmul.f32 %v555, %v555
        %v620 = vmul.f32 %v556, %v556
        %v621 = vmul.f32 %v557, %v557
        %v622 = vmul.f32 %v558, %v558
        %v623 = vmul.f32 %v559, %v559
        %v624 = vmul.f32 %v560, %v560
        %v625 = vadd.f32 %v561, %v562
        %v626 = vadd.f32 %v625, %v563
        %v627 = vadd.f32 %v626, %v564
        %628 = vadd.xlane.f32.xlu0 %v627
        %v629 = vpop.xlane.xlu0 %628
        %v630 = vadd.f32 %v565, %v566
        %v631 = vadd.f32 %v630, %v567
        %v632 = vadd.f32 %v631, %v568
        %633 = vadd.xlane.f32.xlu0 %v632
        %v634 = vpop.xlane.xlu0 %633
        %v635 = vadd.f32 %v569, %v570
        %v636 = vadd.f32 %v635, %v571
        %v637 = vadd.f32 %v636, %v572
        %638 = vadd.xlane.f32.xlu0 %v637
        %v639 = vpop.xlane.xlu0 %638
        %v640 = vadd.f32 %v573, %v574
        %v641 = vadd.f32 %v640, %v575
        %v642 = vadd.f32 %v641, %v576
        %643 = vadd.xlane.f32.xlu0 %v642
        %v644 = vpop.xlane.xlu0 %643
        %v645 = vadd.f32 %v577, %v578
        %v646 = vadd.f32 %v645, %v579
        %v647 = vadd.f32 %v646, %v580
        %648 = vadd.xlane.f32.xlu0 %v647
        %v649 = vpop.xlane.xlu0 %648
        %v650 = vadd.f32 %v581, %v582
        %v651 = vadd.f32 %v650, %v583
        %v652 = vadd.f32 %v651, %v584
        %653 = vadd.xlane.f32.xlu0 %v652
        %v654 = vpop.xlane.xlu0 %653
        %v655 = vadd.f32 %v585, %v586
        %v656 = vadd.f32 %v655, %v587
        %v657 = vadd.f32 %v656, %v588
        %658 = vadd.xlane.f32.xlu0 %v657
        %v659 = vpop.xlane.xlu0 %658
        %v660 = vadd.f32 %v589, %v590
        %v661 = vadd.f32 %v660, %v591
        %v662 = vadd.f32 %v661, %v592
        %663 = vadd.xlane.f32.xlu0 %v662
        %v664 = vpop.xlane.xlu0 %663
        %v665 = vadd.f32 %v593, %v594
        %v666 = vadd.f32 %v665, %v595
        %v667 = vadd.f32 %v666, %v596
        %668 = vadd.xlane.f32.xlu0 %v667
        %v669 = vpop.xlane.xlu0 %668
        %v670 = vadd.f32 %v597, %v598
        %v671 = vadd.f32 %v670, %v599
        %v672 = vadd.f32 %v671, %v600
        %673 = vadd.xlane.f32.xlu0 %v672
        %v674 = vpop.xlane.xlu0 %673
        %v675 = vadd.f32 %v601, %v602
        %v676 = vadd.f32 %v675, %v603
        %v677 = vadd.f32 %v676, %v604
        %678 = vadd.xlane.f32.xlu0 %v677
        %v679 = vpop.xlane.xlu0 %678
        %v680 = vadd.f32 %v605, %v606
        %v681 = vadd.f32 %v680, %v607
        %v682 = vadd.f32 %v681, %v608
        %683 = vadd.xlane.f32.xlu0 %v682
        %v684 = vpop.xlane.xlu0 %683
        %v685 = vadd.f32 %v609, %v610
        %v686 = vadd.f32 %v685, %v611
        %v687 = vadd.f32 %v686, %v612
        %688 = vadd.xlane.f32.xlu0 %v687
        %v689 = vpop.xlane.xlu0 %688
        %v690 = vadd.f32 %v613, %v614
        %v691 = vadd.f32 %v690, %v615
        %v692 = vadd.f32 %v691, %v616
        %693 = vadd.xlane.f32.xlu0 %v692
        %v694 = vpop.xlane.xlu0 %693
        %v695 = vadd.f32 %v617, %v618
        %v696 = vadd.f32 %v695, %v619
        %v697 = vadd.f32 %v696, %v620
        %698 = vadd.xlane.f32.xlu0 %v697
        %v699 = vpop.xlane.xlu0 %698
        %v700 = vadd.f32 %v621, %v622
        %v701 = vadd.f32 %v700, %v623
        %v702 = vadd.f32 %v701, %v624
        %703 = vadd.xlane.f32.xlu0 %v702
        %v704 = vpop.xlane.xlu0 %703
        %vm705 = vcmp.gt.f32.partialorder %v629, 0.0
        %vm706 = vcmp.gt.f32.partialorder %v634, 0.0
        %vm707 = vcmp.gt.f32.partialorder %v639, 0.0
        %vm708 = vcmp.gt.f32.partialorder %v644, 0.0
        %vm709 = vcmp.gt.f32.partialorder %v649, 0.0
        %vm710 = vcmp.gt.f32.partialorder %v654, 0.0
        %vm711 = vcmp.gt.f32.partialorder %v659, 0.0
        %vm712 = vcmp.gt.f32.partialorder %v664, 0.0
        %vm713 = vcmp.gt.f32.partialorder %v669, 0.0
        %vm714 = vcmp.gt.f32.partialorder %v674, 0.0
        %vm715 = vcmp.gt.f32.partialorder %v679, 0.0
        %vm716 = vcmp.gt.f32.partialorder %v684, 0.0
        %vm717 = vcmp.gt.f32.partialorder %v689, 0.0
        %vm718 = vcmp.gt.f32.partialorder %v694, 0.0
        %vm719 = vcmp.gt.f32.partialorder %v699, 0.0
        %vm720 = vcmp.gt.f32.partialorder %v704, 0.0
        %v721 = vrsqrt.pop %v629
        %v722 = vrsqrt.pop %v634
        %v723 = vrsqrt.pop %v639
        %v724 = vrsqrt.pop %v644
        %v725 = vrsqrt.pop %v649
        %v726 = vrsqrt.pop %v654
        %v727 = vrsqrt.pop %v659
        %v728 = vrsqrt.pop %v664
        %v729 = vrsqrt.pop %v669
        %v730 = vrsqrt.pop %v674
        %v731 = vrsqrt.pop %v679
        %v732 = vrsqrt.pop %v684
        %v733 = vrsqrt.pop %v689
        %v734 = vrsqrt.pop %v694
        %v735 = vrsqrt.pop %v699
        %v736 = vrsqrt.pop %v704
        %v737 = vsel %vm705, %v721, 0.0
        %v738 = vsel %vm706, %v722, 0.0
        %v739 = vsel %vm707, %v723, 0.0
        %v740 = vsel %vm708, %v724, 0.0
        %v741 = vsel %vm709, %v725, 0.0
        %v742 = vsel %vm710, %v726, 0.0
        %v743 = vsel %vm711, %v727, 0.0
        %v744 = vsel %vm712, %v728, 0.0
        %v745 = vsel %vm713, %v729, 0.0
        %v746 = vsel %vm714, %v730, 0.0
        %v747 = vsel %vm715, %v731, 0.0
        %v748 = vsel %vm716, %v732, 0.0
        %v749 = vsel %vm717, %v733, 0.0
        %v750 = vsel %vm718, %v734, 0.0
        %v751 = vsel %vm719, %v735, 0.0
        %v752 = vsel %vm720, %v736, 0.0
        %p753 = scmp.eq.s32.totalorder %s25, 0
        // Predicated region
        $region41: #{hd_classifier_forward.1} parent=35 // pred_check
          %p754 = pneg %p753
        $region42: #{hd_classifier_forward.1} parent=35 // pred_check_branch
          %756 = sbr.rel (%p754) target = $region44
        $region43: #{hd_classifier_forward.1} parent=35 // pred_region
          %v757 = vld [vmem:[%s325] sm:$0xff]
          %v758 = vld [vmem:[%s325 + $0x8] sm:$0xff]
          %v759 = vld [vmem:[%s325 + $0x10] sm:$0xff]
          %v760 = vld [vmem:[%s325 + $0x18] sm:$0xff]
          %v761 = vld [vmem:[%s325 + $0x20] sm:$0xff]
          %v762 = vld [vmem:[%s325 + $0x28] sm:$0xff]
          %v763 = vld [vmem:[%s325 + $0x30] sm:$0xff]
          %v764 = vld [vmem:[%s325 + $0x38] sm:$0xff]
          %v765 = vld [vmem:[%s325 + $0x40] sm:$0xff]
          %v766 = vld [vmem:[%s325 + $0x48] sm:$0xff]
          %v767 = vld [vmem:[%s325 + $0x50] sm:$0xff]
          %v768 = vld [vmem:[%s325 + $0x58] sm:$0xff]
          %v769 = vld [vmem:[%s325 + $0x60] sm:$0xff]
          %v770 = vld [vmem:[%s325 + $0x68] sm:$0xff]
          %v771 = vld [vmem:[%s325 + $0x70] sm:$0xff]
          %v772 = vld [vmem:[%s325 + $0x78] sm:$0xff]
          %v773 = vld [vmem:[%s325 + $0x80] sm:$0xff]
          %v774 = vld [vmem:[%s325 + $0x88] sm:$0xff]
          %v775 = vld [vmem:[%s325 + $0x90] sm:$0xff]
          %v776 = vld [vmem:[%s325 + $0x98] sm:$0xff]
          %v777 = vld [vmem:[%s325 + $0xa0] sm:$0xff]
          %v778 = vld [vmem:[%s325 + $0xa8] sm:$0xff]
          %v779 = vld [vmem:[%s325 + $0xb0] sm:$0xff]
          %v780 = vld [vmem:[%s325 + $0xb8] sm:$0xff]
          %v781 = vld [vmem:[%s325 + $0xc0] sm:$0xff]
          %v782 = vld [vmem:[%s325 + $0xc8] sm:$0xff]
          %v783 = vld [vmem:[%s325 + $0xd0] sm:$0xff]
          %v784 = vld [vmem:[%s325 + $0xd8] sm:$0xff]
          %v785 = vld [vmem:[%s325 + $0xe0] sm:$0xff]
          %v786 = vld [vmem:[%s325 + $0xe8] sm:$0xff]
          %v787 = vld [vmem:[%s325 + $0xf0] sm:$0xff]
          %v788 = vld [vmem:[%s325 + $0xf8] sm:$0xff]
          %v789 = vld [vmem:[%s325 + $0x100] sm:$0xff]
          %v790 = vld [vmem:[%s325 + $0x108] sm:$0xff]
          %v791 = vld [vmem:[%s325 + $0x110] sm:$0xff]
          %v792 = vld [vmem:[%s325 + $0x118] sm:$0xff]
          %v793 = vld [vmem:[%s325 + $0x120] sm:$0xff]
          %v794 = vld [vmem:[%s325 + $0x128] sm:$0xff]
          %v795 = vld [vmem:[%s325 + $0x130] sm:$0xff]
          %v796 = vld [vmem:[%s325 + $0x138] sm:$0xff]
          %v797 = vld [vmem:[%s325 + $0x140] sm:$0xff]
          %v798 = vld [vmem:[%s325 + $0x148] sm:$0xff]
          %v799 = vld [vmem:[%s325 + $0x150] sm:$0xff]
          %v800 = vld [vmem:[%s325 + $0x158] sm:$0xff]
          %v801 = vld [vmem:[%s325 + $0x160] sm:$0xff]
          %v802 = vld [vmem:[%s325 + $0x168] sm:$0xff]
          %v803 = vld [vmem:[%s325 + $0x170] sm:$0xff]
          %v804 = vld [vmem:[%s325 + $0x178] sm:$0xff]
          %v805 = vld [vmem:[%s325 + $0x180] sm:$0xff]
          %v806 = vld [vmem:[%s325 + $0x188] sm:$0xff]
          %v807 = vld [vmem:[%s325 + $0x190] sm:$0xff]
          %v808 = vld [vmem:[%s325 + $0x198] sm:$0xff]
          %v809 = vld [vmem:[%s325 + $0x1a0] sm:$0xff]
          %v810 = vld [vmem:[%s325 + $0x1a8] sm:$0xff]
          %v811 = vld [vmem:[%s325 + $0x1b0] sm:$0xff]
          %v812 = vld [vmem:[%s325 + $0x1b8] sm:$0xff]
          %v813 = vld [vmem:[%s325 + $0x1c0] sm:$0xff]
          %v814 = vld [vmem:[%s325 + $0x1c8] sm:$0xff]
          %v815 = vld [vmem:[%s325 + $0x1d0] sm:$0xff]
          %v816 = vld [vmem:[%s325 + $0x1d8] sm:$0xff]
          %v817 = vld [vmem:[%s325 + $0x1e0] sm:$0xff]
          %v818 = vld [vmem:[%s325 + $0x1e8] sm:$0xff]
          %v819 = vld [vmem:[%s325 + $0x1f0] sm:$0xff]
          %v820 = vld [vmem:[%s325 + $0x1f8] sm:$0xff]
          %v821 = vpack.c.bf16 %v761, %v757
          %v822 = vpack.c.bf16 %v762, %v758
          %v823 = vpack.c.bf16 %v763, %v759
          %v824 = vpack.c.bf16 %v764, %v760
          %v825 = vpack.c.bf16 %v769, %v765
          %v826 = vpack.c.bf16 %v770, %v766
          %v827 = vpack.c.bf16 %v771, %v767
          %v828 = vpack.c.bf16 %v772, %v768
          %v829 = vpack.c.bf16 %v777, %v773
          %v830 = vpack.c.bf16 %v778, %v774
          %v831 = vpack.c.bf16 %v779, %v775
          %v832 = vpack.c.bf16 %v780, %v776
          %v833 = vpack.c.bf16 %v785, %v781
          %v834 = vpack.c.bf16 %v786, %v782
          %v835 = vpack.c.bf16 %v787, %v783
          %v836 = vpack.c.bf16 %v788, %v784
          %v837 = vpack.c.bf16 %v793, %v789
          %v838 = vpack.c.bf16 %v794, %v790
          %v839 = vpack.c.bf16 %v795, %v791
          %v840 = vpack.c.bf16 %v796, %v792
          %v841 = vpack.c.bf16 %v801, %v797
          %v842 = vpack.c.bf16 %v802, %v798
          %v843 = vpack.c.bf16 %v803, %v799
          %v844 = vpack.c.bf16 %v804, %v800
          %v845 = vpack.c.bf16 %v809, %v805
          %v846 = vpack.c.bf16 %v810, %v806
          %v847 = vpack.c.bf16 %v811, %v807
          %v848 = vpack.c.bf16 %v812, %v808
          %v849 = vpack.c.bf16 %v817, %v813
          %v850 = vpack.c.bf16 %v818, %v814
          %v851 = vpack.c.bf16 %v819, %v815
          %v852 = vpack.c.bf16 %v820, %v816
          %853 = vst [vmem:[#allocation2] sm:$0xff] %v821
          %854 = vst [vmem:[#allocation2 + $0x8] sm:$0xff] %v822
          %855 = vst [vmem:[#allocation2 + $0x10] sm:$0xff] %v823
          %856 = vst [vmem:[#allocation2 + $0x18] sm:$0xff] %v824
          %857 = vst [vmem:[#allocation2 + $0x20] sm:$0xff] %v825
          %858 = vst [vmem:[#allocation2 + $0x28] sm:$0xff] %v826
          %859 = vst [vmem:[#allocation2 + $0x30] sm:$0xff] %v827
          %860 = vst [vmem:[#allocation2 + $0x38] sm:$0xff] %v828
          %861 = vst [vmem:[#allocation2 + $0x40] sm:$0xff] %v829
          %862 = vst [vmem:[#allocation2 + $0x48] sm:$0xff] %v830
          %863 = vst [vmem:[#allocation2 + $0x50] sm:$0xff] %v831
          %864 = vst [vmem:[#allocation2 + $0x58] sm:$0xff] %v832
          %865 = vst [vmem:[#allocation2 + $0x60] sm:$0xff] %v833
          %866 = vst [vmem:[#allocation2 + $0x68] sm:$0xff] %v834
          %867 = vst [vmem:[#allocation2 + $0x70] sm:$0xff] %v835
          %868 = vst [vmem:[#allocation2 + $0x78] sm:$0xff] %v836
          %869 = vst [vmem:[#allocation2 + $0x80] sm:$0xff] %v837
          %870 = vst [vmem:[#allocation2 + $0x88] sm:$0xff] %v838
          %871 = vst [vmem:[#allocation2 + $0x90] sm:$0xff] %v839
          %872 = vst [vmem:[#allocation2 + $0x98] sm:$0xff] %v840
          %873 = vst [vmem:[#allocation2 + $0xa0] sm:$0xff] %v841
          %874 = vst [vmem:[#allocation2 + $0xa8] sm:$0xff] %v842
          %875 = vst [vmem:[#allocation2 + $0xb0] sm:$0xff] %v843
          %876 = vst [vmem:[#allocation2 + $0xb8] sm:$0xff] %v844
          %877 = vst [vmem:[#allocation2 + $0xc0] sm:$0xff] %v845
          %878 = vst [vmem:[#allocation2 + $0xc8] sm:$0xff] %v846
          %879 = vst [vmem:[#allocation2 + $0xd0] sm:$0xff] %v847
          %880 = vst [vmem:[#allocation2 + $0xd8] sm:$0xff] %v848
          %881 = vst [vmem:[#allocation2 + $0xe0] sm:$0xff] %v849
          %882 = vst [vmem:[#allocation2 + $0xe8] sm:$0xff] %v850
          %883 = vst [vmem:[#allocation2 + $0xf0] sm:$0xff] %v851
          %884 = vst [vmem:[#allocation2 + $0xf8] sm:$0xff] %v852
        $region44: #{hd_classifier_forward.1} parent=35 // pred_fallthru
          _
        %v885 = vpack.c.bf16 %v501, %v497
        %v886 = vpack.c.bf16 %v502, %v498
        %v887 = vpack.c.bf16 %v503, %v499
        %v888 = vpack.c.bf16 %v504, %v500
        %v889 = vpack.c.bf16 %v509, %v505
        %v890 = vpack.c.bf16 %v510, %v506
        %v891 = vpack.c.bf16 %v511, %v507
        %v892 = vpack.c.bf16 %v512, %v508
        %v893 = vpack.c.bf16 %v517, %v513
        %v894 = vpack.c.bf16 %v518, %v514
        %v895 = vpack.c.bf16 %v519, %v515
        %v896 = vpack.c.bf16 %v520, %v516
        %v897 = vpack.c.bf16 %v525, %v521
        %v898 = vpack.c.bf16 %v526, %v522
        %v899 = vpack.c.bf16 %v527, %v523
        %v900 = vpack.c.bf16 %v528, %v524
        %v901 = vpack.c.bf16 %v533, %v529
        %v902 = vpack.c.bf16 %v534, %v530
        %v903 = vpack.c.bf16 %v535, %v531
        %v904 = vpack.c.bf16 %v536, %v532
        %v905 = vpack.c.bf16 %v541, %v537
        %v906 = vpack.c.bf16 %v542, %v538
        %v907 = vpack.c.bf16 %v543, %v539
        %v908 = vpack.c.bf16 %v544, %v540
        %v909 = vpack.c.bf16 %v549, %v545
        %v910 = vpack.c.bf16 %v550, %v546
        %v911 = vpack.c.bf16 %v551, %v547
        %v912 = vpack.c.bf16 %v552, %v548
        %v913 = vpack.c.bf16 %v557, %v553
        %v914 = vpack.c.bf16 %v558, %v554
        %v915 = vpack.c.bf16 %v559, %v555
        %v916 = vpack.c.bf16 %v560, %v556
        %v917 = vld [vmem:[#allocation2] sm:$0xff]
        %v918 = vld [vmem:[#allocation2 + $0x8] sm:$0xff]
        %v919 = vld [vmem:[#allocation2 + $0x10] sm:$0xff]
        %v920 = vld [vmem:[#allocation2 + $0x18] sm:$0xff]
        %v921 = vld [vmem:[#allocation2 + $0x20] sm:$0xff]
        %v922 = vld [vmem:[#allocation2 + $0x28] sm:$0xff]
        %v923 = vld [vmem:[#allocation2 + $0x30] sm:$0xff]
        %v924 = vld [vmem:[#allocation2 + $0x38] sm:$0xff]
        %v925 = vld [vmem:[#allocation2 + $0x40] sm:$0xff]
        %v926 = vld [vmem:[#allocation2 + $0x48] sm:$0xff]
        %v927 = vld [vmem:[#allocation2 + $0x50] sm:$0xff]
        %v928 = vld [vmem:[#allocation2 + $0x58] sm:$0xff]
        %v929 = vld [vmem:[#allocation2 + $0x60] sm:$0xff]
        %v930 = vld [vmem:[#allocation2 + $0x68] sm:$0xff]
        %v931 = vld [vmem:[#allocation2 + $0x70] sm:$0xff]
        %v932 = vld [vmem:[#allocation2 + $0x78] sm:$0xff]
        %v933 = vld [vmem:[#allocation2 + $0x80] sm:$0xff]
        %v934 = vld [vmem:[#allocation2 + $0x88] sm:$0xff]
        %v935 = vld [vmem:[#allocation2 + $0x90] sm:$0xff]
        %v936 = vld [vmem:[#allocation2 + $0x98] sm:$0xff]
        %v937 = vld [vmem:[#allocation2 + $0xa0] sm:$0xff]
        %v938 = vld [vmem:[#allocation2 + $0xa8] sm:$0xff]
        %v939 = vld [vmem:[#allocation2 + $0xb0] sm:$0xff]
        %v940 = vld [vmem:[#allocation2 + $0xb8] sm:$0xff]
        %v941 = vld [vmem:[#allocation2 + $0xc0] sm:$0xff]
        %v942 = vld [vmem:[#allocation2 + $0xc8] sm:$0xff]
        %v943 = vld [vmem:[#allocation2 + $0xd0] sm:$0xff]
        %v944 = vld [vmem:[#allocation2 + $0xd8] sm:$0xff]
        %v945 = vld [vmem:[#allocation2 + $0xe0] sm:$0xff]
        %v946 = vld [vmem:[#allocation2 + $0xe8] sm:$0xff]
        %v947 = vld [vmem:[#allocation2 + $0xf0] sm:$0xff]
        %v948 = vld [vmem:[#allocation2 + $0xf8] sm:$0xff]
        %949 = vmatprep.subr.bf16.mxu0 %v918
        %950 = vmatpush1.bf16.xpose.msra.mxu0 %v917
        %951 = vmatprep.subr.bf16.mxu0 %v922
        %952 = vmatpush1.bf16.xpose.msra.mxu0 %v921
        %953 = vmatprep.subr.bf16.mxu0 %v926
        %954 = vmatpush1.bf16.xpose.msra.mxu0 %v925
        %955 = vmatprep.subr.bf16.mxu0 %v930
        %956 = vmatpush1.bf16.xpose.msra.mxu0 %v929
        %957 = vmatprep.subr.bf16.mxu0 %v934
        %958 = vmatpush1.bf16.xpose.msra.mxu0 %v933
        %959 = vmatprep.subr.bf16.mxu0 %v938
        %960 = vmatpush1.bf16.xpose.msra.mxu0 %v937
        %961 = vmatprep.subr.bf16.mxu0 %v942
        %962 = vmatpush1.bf16.xpose.msra.mxu0 %v941
        %963 = vmatprep.subr.bf16.mxu0 %v946
        %964 = vmatpush1.bf16.xpose.msra.mxu0 %v945
        %965 = vmatprep.subr.bf16.mxu0 0
        %966 = vmatpush1.bf16.xpose.msra.mxu0 0
        %967 = vmatprep.subr.bf16.mxu0 0
        %968 = vmatpush1.bf16.xpose.msra.mxu0 0
        %969 = vmatprep.subr.bf16.mxu0 0
        %970 = vmatpush1.bf16.xpose.msra.mxu0 0
        %971 = vmatprep.subr.bf16.mxu0 0
        %972 = vmatpush1.bf16.xpose.msra.mxu0 0
        %973 = vmatprep.subr.bf16.mxu0 0
        %974 = vmatpush1.bf16.xpose.msra.mxu0 0
        %975 = vmatprep.subr.bf16.mxu0 0
        %976 = vmatpush1.bf16.xpose.msra.mxu0 0
        %977 = vmatprep.subr.bf16.mxu0 0
        %978 = vmatpush1.bf16.xpose.msra.mxu0 0
        %979 = vmatprep.subr.bf16.mxu0 0
        %980 = vmatpush1.bf16.xpose.msra.mxu0 0
        %981 = vmatprep.mubr.bf16.mxu0 %v886
        %982 = vmatmul.mubr.bf16.gmra.mrb[0].mxu0 %v885
        %v983 = vpop.f32.mrb[0].mxu0
        %v984 = vadd.f32 0.0, %v983
        %v985 = vpop.f32.mrb[0].mxu0
        %v986 = vpop.f32.mrb[0].mxu0
        %v987 = vadd.f32 0.0, %v986
        %v988 = vpop.f32.mrb[0].mxu0
        %989 = vmatprep.mubr.bf16.mxu0 %v890
        %990 = vmatmul.mubr.bf16.gmra.mrb[0].mxu0 %v889
        %v991 = vpop.f32.mrb[0].mxu0
        %v992 = vadd.f32 0.0, %v991
        %v993 = vpop.f32.mrb[0].mxu0
        %v994 = vpop.f32.mrb[0].mxu0
        %v995 = vadd.f32 0.0, %v994
        %v996 = vpop.f32.mrb[0].mxu0
        %997 = vmatprep.mubr.bf16.mxu0 %v894
        %998 = vmatmul.mubr.bf16.gmra.mrb[0].mxu0 %v893
        %v999 = vpop.f32.mrb[0].mxu0
        %v1000 = vadd.f32 0.0, %v999
        %v1001 = vpop.f32.mrb[0].mxu0
        %v1002 = vpop.f32.mrb[0].mxu0
        %v1003 = vadd.f32 0.0, %v1002
        %v1004 = vpop.f32.mrb[0].mxu0
        %1005 = vmatprep.mubr.bf16.mxu0 %v898
        %1006 = vmatmul.mubr.bf16.gmra.mrb[0].mxu0 %v897
        %v1007 = vpop.f32.mrb[0].mxu0
        %v1008 = vadd.f32 0.0, %v1007
        %v1009 = vpop.f32.mrb[0].mxu0
        %v1010 = vpop.f32.mrb[0].mxu0
        %v1011 = vadd.f32 0.0, %v1010
        %v1012 = vpop.f32.mrb[0].mxu0
        %1013 = vmatprep.mubr.bf16.mxu0 %v902
        %1014 = vmatmul.mubr.bf16.gmra.mrb[0].mxu0 %v901
        %v1015 = vpop.f32.mrb[0].mxu0
        %v1016 = vadd.f32 0.0, %v1015
        %v1017 = vpop.f32.mrb[0].mxu0
        %v1018 = vpop.f32.mrb[0].mxu0
        %v1019 = vadd.f32 0.0, %v1018
        %v1020 = vpop.f32.mrb[0].mxu0
        %1021 = vmatprep.mubr.bf16.mxu0 %v906
        %1022 = vmatmul.mubr.bf16.gmra.mrb[0].mxu0 %v905
        %v1023 = vpop.f32.mrb[0].mxu0
        %v1024 = vadd.f32 0.0, %v1023
        %v1025 = vpop.f32.mrb[0].mxu0
        %v1026 = vpop.f32.mrb[0].mxu0
        %v1027 = vadd.f32 0.0, %v1026
        %v1028 = vpop.f32.mrb[0].mxu0
        %1029 = vmatprep.mubr.bf16.mxu0 %v910
        %1030 = vmatmul.mubr.bf16.gmra.mrb[0].mxu0 %v909
        %v1031 = vpop.f32.mrb[0].mxu0
        %v1032 = vadd.f32 0.0, %v1031
        %v1033 = vpop.f32.mrb[0].mxu0
        %v1034 = vpop.f32.mrb[0].mxu0
        %v1035 = vadd.f32 0.0, %v1034
        %v1036 = vpop.f32.mrb[0].mxu0
        %1037 = vmatprep.mubr.bf16.mxu0 %v914
        %1038 = vmatmul.mubr.bf16.gmra.mrb[0].mxu0 %v913
        %v1039 = vpop.f32.mrb[0].mxu0
        %v1040 = vadd.f32 0.0, %v1039
        %v1041 = vpop.f32.mrb[0].mxu0
        %v1042 = vpop.f32.mrb[0].mxu0
        %v1043 = vadd.f32 0.0, %v1042
        %v1044 = vpop.f32.mrb[0].mxu0
        %1045 = vdwg.mxu0
        %1046 = vmatprep.subr.bf16.mxu0 %v920
        %1047 = vmatpush1.bf16.xpose.msra.mxu0 %v919
        %1048 = vmatprep.subr.bf16.mxu0 %v924
        %1049 = vmatpush1.bf16.xpose.msra.mxu0 %v923
        %1050 = vmatprep.subr.bf16.mxu0 %v928
        %1051 = vmatpush1.bf16.xpose.msra.mxu0 %v927
        %1052 = vmatprep.subr.bf16.mxu0 %v932
        %1053 = vmatpush1.bf16.xpose.msra.mxu0 %v931
        %1054 = vmatprep.subr.bf16.mxu0 %v936
        %1055 = vmatpush1.bf16.xpose.msra.mxu0 %v935
        %1056 = vmatprep.subr.bf16.mxu0 %v940
        %1057 = vmatpush1.bf16.xpose.msra.mxu0 %v939
        %1058 = vmatprep.subr.bf16.mxu0 %v944
        %1059 = vmatpush1.bf16.xpose.msra.mxu0 %v943
        %1060 = vmatprep.subr.bf16.mxu0 %v948
        %1061 = vmatpush1.bf16.xpose.msra.mxu0 %v947
        %1062 = vmatprep.subr.bf16.mxu0 0
        %1063 = vmatpush1.bf16.xpose.msra.mxu0 0
        %1064 = vmatprep.subr.bf16.mxu0 0
        %1065 = vmatpush1.bf16.xpose.msra.mxu0 0
        %1066 = vmatprep.subr.bf16.mxu0 0
        %1067 = vmatpush1.bf16.xpose.msra.mxu0 0
        %1068 = vmatprep.subr.bf16.mxu0 0
        %1069 = vmatpush1.bf16.xpose.msra.mxu0 0
        %1070 = vmatprep.subr.bf16.mxu0 0
        %1071 = vmatpush1.bf16.xpose.msra.mxu0 0
        %1072 = vmatprep.subr.bf16.mxu0 0
        %1073 = vmatpush1.bf16.xpose.msra.mxu0 0
        %1074 = vmatprep.subr.bf16.mxu0 0
        %1075 = vmatpush1.bf16.xpose.msra.mxu0 0
        %1076 = vmatprep.subr.bf16.mxu0 0
        %1077 = vmatpush1.bf16.xpose.msra.mxu0 0
        %1078 = vmatprep.mubr.bf16.mxu0 %v888
        %1079 = vmatmul.mubr.bf16.gmra.mrb[0].mxu0 %v887
        %v1080 = vpop.f32.mrb[0].mxu0
        %v1081 = vadd.f32 %v984, %v1080
        %v1082 = vpop.f32.mrb[0].mxu0
        %v1083 = vpop.f32.mrb[0].mxu0
        %v1084 = vadd.f32 %v987, %v1083
        %v1085 = vpop.f32.mrb[0].mxu0
        %1086 = vmatprep.mubr.bf16.mxu0 %v892
        %1087 = vmatmul.mubr.bf16.gmra.mrb[0].mxu0 %v891
        %v1088 = vpop.f32.mrb[0].mxu0
        %v1089 = vadd.f32 %v992, %v1088
        %v1090 = vpop.f32.mrb[0].mxu0
        %v1091 = vpop.f32.mrb[0].mxu0
        %v1092 = vadd.f32 %v995, %v1091
        %v1093 = vpop.f32.mrb[0].mxu0
        %1094 = vmatprep.mubr.bf16.mxu0 %v896
        %1095 = vmatmul.mubr.bf16.gmra.mrb[0].mxu0 %v895
        %v1096 = vpop.f32.mrb[0].mxu0
        %v1097 = vadd.f32 %v1000, %v1096
        %v1098 = vpop.f32.mrb[0].mxu0
        %v1099 = vpop.f32.mrb[0].mxu0
        %v1100 = vadd.f32 %v1003, %v1099
        %v1101 = vpop.f32.mrb[0].mxu0
        %1102 = vmatprep.mubr.bf16.mxu0 %v900
        %1103 = vmatmul.mubr.bf16.gmra.mrb[0].mxu0 %v899
        %v1104 = vpop.f32.mrb[0].mxu0
        %v1105 = vadd.f32 %v1008, %v1104
        %v1106 = vpop.f32.mrb[0].mxu0
        %v1107 = vpop.f32.mrb[0].mxu0
        %v1108 = vadd.f32 %v1011, %v1107
        %v1109 = vpop.f32.mrb[0].mxu0
        %1110 = vmatprep.mubr.bf16.mxu0 %v904
        %1111 = vmatmul.mubr.bf16.gmra.mrb[0].mxu0 %v903
        %v1112 = vpop.f32.mrb[0].mxu0
        %v1113 = vadd.f32 %v1016, %v1112
        %v1114 = vpop.f32.mrb[0].mxu0
        %v1115 = vpop.f32.mrb[0].mxu0
        %v1116 = vadd.f32 %v1019, %v1115
        %v1117 = vpop.f32.mrb[0].mxu0
        %1118 = vmatprep.mubr.bf16.mxu0 %v908
        %1119 = vmatmul.mubr.bf16.gmra.mrb[0].mxu0 %v907
        %v1120 = vpop.f32.mrb[0].mxu0
        %v1121 = vadd.f32 %v1024, %v1120
        %v1122 = vpop.f32.mrb[0].mxu0
        %v1123 = vpop.f32.mrb[0].mxu0
        %v1124 = vadd.f32 %v1027, %v1123
        %v1125 = vpop.f32.mrb[0].mxu0
        %1126 = vmatprep.mubr.bf16.mxu0 %v912
        %1127 = vmatmul.mubr.bf16.gmra.mrb[0].mxu0 %v911
        %v1128 = vpop.f32.mrb[0].mxu0
        %v1129 = vadd.f32 %v1032, %v1128
        %v1130 = vpop.f32.mrb[0].mxu0
        %v1131 = vpop.f32.mrb[0].mxu0
        %v1132 = vadd.f32 %v1035, %v1131
        %v1133 = vpop.f32.mrb[0].mxu0
        %1134 = vmatprep.mubr.bf16.mxu0 %v916
        %1135 = vmatmul.mubr.bf16.gmra.mrb[0].mxu0 %v915
        %v1136 = vpop.f32.mrb[0].mxu0
        %v1137 = vadd.f32 %v1040, %v1136
        %v1138 = vpop.f32.mrb[0].mxu0
        %v1139 = vpop.f32.mrb[0].mxu0
        %v1140 = vadd.f32 %v1043, %v1139
        %v1141 = vpop.f32.mrb[0].mxu0
        %1142 = vdwg.mxu0
        %v1143 = vmul.f32 %v1081, %v737
        %v1144 = vmul.f32 %v1084, %v738
        %v1145 = vmul.f32 %v1089, %v739
        %v1146 = vmul.f32 %v1092, %v740
        %v1147 = vmul.f32 %v1097, %v741
        %v1148 = vmul.f32 %v1100, %v742
        %v1149 = vmul.f32 %v1105, %v743
        %v1150 = vmul.f32 %v1108, %v744
        %v1151 = vmul.f32 %v1113, %v745
        %v1152 = vmul.f32 %v1116, %v746
        %v1153 = vmul.f32 %v1121, %v747
        %v1154 = vmul.f32 %v1124, %v748
        %v1155 = vmul.f32 %v1129, %v749
        %v1156 = vmul.f32 %v1132, %v750
        %v1157 = vmul.f32 %v1137, %v751
        %v1158 = vmul.f32 %v1140, %v752
        %v1159 = vld [vmem:[%s329] sm:$0x1]
        %v1161 = vlaneseq
        %v1162 = vshrl.u32 %v1161, 7
        %v1163 = vsub.s32 0, %v1162
        %v1164 = vrot.slane %v1159, %v1163
        %v1166 = vmul.f32 %v1143, %v1164
        %v1167 = vmul.f32 %v1144, %v1164
        %v1168 = vmul.f32 %v1145, %v1164
        %v1169 = vmul.f32 %v1146, %v1164
        %v1170 = vmul.f32 %v1147, %v1164
        %v1171 = vmul.f32 %v1148, %v1164
        %v1172 = vmul.f32 %v1149, %v1164
        %v1173 = vmul.f32 %v1150, %v1164
        %v1174 = vmul.f32 %v1151, %v1164
        %v1175 = vmul.f32 %v1152, %v1164
        %v1176 = vmul.f32 %v1153, %v1164
        %v1177 = vmul.f32 %v1154, %v1164
        %v1178 = vmul.f32 %v1155, %v1164
        %v1179 = vmul.f32 %v1156, %v1164
        %v1180 = vmul.f32 %v1157, %v1164
        %v1181 = vmul.f32 %v1158, %v1164
        %1182 = vst [vmem:[%s340] sm:$0xff] %v1166
        %1183 = vst [vmem:[%s340 + $0x8] sm:$0xff] %v1167
        %1184 = vst [vmem:[%s340 + $0x10] sm:$0xff] %v1168
        %1185 = vst [vmem:[%s340 + $0x18] sm:$0xff] %v1169
        %1186 = vst [vmem:[%s340 + $0x20] sm:$0xff] %v1170
        %1187 = vst [vmem:[%s340 + $0x28] sm:$0xff] %v1171
        %1188 = vst [vmem:[%s340 + $0x30] sm:$0xff] %v1172
        %1189 = vst [vmem:[%s340 + $0x38] sm:$0xff] %v1173
        %1190 = vst [vmem:[%s340 + $0x40] sm:$0xff] %v1174
        %1191 = vst [vmem:[%s340 + $0x48] sm:$0xff] %v1175
        %1192 = vst [vmem:[%s340 + $0x50] sm:$0xff] %v1176
        %1193 = vst [vmem:[%s340 + $0x58] sm:$0xff] %v1177
        %1194 = vst [vmem:[%s340 + $0x60] sm:$0xff] %v1178
        %1195 = vst [vmem:[%s340 + $0x68] sm:$0xff] %v1179
        %1196 = vst [vmem:[%s340 + $0x70] sm:$0xff] %v1180
        %1197 = vst [vmem:[%s340 + $0x78] sm:$0xff] %v1181
        %s1198 = smul.u32 %s24, 128
        %v1199 = vstv %s1198
        %v1200 = vadd.s32 %v1199, %v416
        %v1201 = vadd.s32 %v1199, %v417
        %v1202 = vadd.s32 %v1199, %v418
        %v1203 = vadd.s32 %v1199, %v419
        %v1204 = vadd.s32 %v1199, %v420
        %v1205 = vadd.s32 %v1199, %v421
        %v1206 = vadd.s32 %v1199, %v422
        %v1207 = vadd.s32 %v1199, %v423
        %v1208 = vadd.s32 %v1199, %v424
        %v1209 = vadd.s32 %v1199, %v425
        %v1210 = vadd.s32 %v1199, %v426
        %v1211 = vadd.s32 %v1199, %v427
        %v1212 = vadd.s32 %v1199, %v428
        %v1213 = vadd.s32 %v1199, %v429
        %v1214 = vadd.s32 %v1199, %v430
        %v1215 = vadd.s32 %v1199, %v431
        %v1216 = vld [vmem:[%s332] sm:$0x1]
        %v1217 = vlaneseq
        %v1218 = vshrl.u32 %v1217, 7
        %v1219 = vsub.s32 0, %v1218
        %v1220 = vrot.slane %v1216, %v1219
        %vm1221 = vcmp.eq.s32.totalorder %v1200, %v1220
        %vm1222 = vcmp.eq.s32.totalorder %v1201, %v1220
        %vm1223 = vcmp.eq.s32.totalorder %v1202, %v1220
        %vm1224 = vcmp.eq.s32.totalorder %v1203, %v1220
        %vm1225 = vcmp.eq.s32.totalorder %v1204, %v1220
        %vm1226 = vcmp.eq.s32.totalorder %v1205, %v1220
        %vm1227 = vcmp.eq.s32.totalorder %v1206, %v1220
        %vm1228 = vcmp.eq.s32.totalorder %v1207, %v1220
        %vm1229 = vcmp.eq.s32.totalorder %v1208, %v1220
        %vm1230 = vcmp.eq.s32.totalorder %v1209, %v1220
        %vm1231 = vcmp.eq.s32.totalorder %v1210, %v1220
        %vm1232 = vcmp.eq.s32.totalorder %v1211, %v1220
        %vm1233 = vcmp.eq.s32.totalorder %v1212, %v1220
        %vm1234 = vcmp.eq.s32.totalorder %v1213, %v1220
        %vm1235 = vcmp.eq.s32.totalorder %v1214, %v1220
        %vm1236 = vcmp.eq.s32.totalorder %v1215, %v1220
        %v1237 = vsel %vm1221, 1, 0
        %v1238 = vsel %vm1222, 1, 0
        %v1239 = vsel %vm1223, 1, 0
        %v1240 = vsel %vm1224, 1, 0
        %v1241 = vsel %vm1225, 1, 0
        %v1242 = vsel %vm1226, 1, 0
        %v1243 = vsel %vm1227, 1, 0
        %v1244 = vsel %vm1228, 1, 0
        %v1245 = vsel %vm1229, 1, 0
        %v1246 = vsel %vm1230, 1, 0
        %v1247 = vsel %vm1231, 1, 0
        %v1248 = vsel %vm1232, 1, 0
        %v1249 = vsel %vm1233, 1, 0
        %v1250 = vsel %vm1234, 1, 0
        %v1251 = vsel %vm1235, 1, 0
        %v1252 = vsel %vm1236, 1, 0
        %v1253 = vcvt.s32.f32 %v1237
        %v1254 = vcvt.s32.f32 %v1238
        %v1255 = vcvt.s32.f32 %v1239
        %v1256 = vcvt.s32.f32 %v1240
        %v1257 = vcvt.s32.f32 %v1241
        %v1258 = vcvt.s32.f32 %v1242
        %v1259 = vcvt.s32.f32 %v1243
        %v1260 = vcvt.s32.f32 %v1244
        %v1261 = vcvt.s32.f32 %v1245
        %v1262 = vcvt.s32.f32 %v1246
        %v1263 = vcvt.s32.f32 %v1247
        %v1264 = vcvt.s32.f32 %v1248
        %v1265 = vcvt.s32.f32 %v1249
        %v1266 = vcvt.s32.f32 %v1250
        %v1267 = vcvt.s32.f32 %v1251
        %v1268 = vcvt.s32.f32 %v1252
        %1269 = vmatprep.subr.mxu0 %v498
        %1270 = vmatpush1.msra.mxu0 %v497
        %1271 = vmatprep.subr.mxu0 %v502
        %1272 = vmatpush1.msra.mxu0 %v501
        %1273 = vmatprep.subr.mxu0 %v506
        %1274 = vmatpush1.msra.mxu0 %v505
        %1275 = vmatprep.subr.mxu0 %v510
        %1276 = vmatpush1.msra.mxu0 %v509
        %1277 = vmatprep.subr.mxu0 %v514
        %1278 = vmatpush1.msra.mxu0 %v513
        %1279 = vmatprep.subr.mxu0 %v518
        %1280 = vmatpush1.msra.mxu0 %v517
        %1281 = vmatprep.subr.mxu0 %v522
        %1282 = vmatpush1.msra.mxu0 %v521
        %1283 = vmatprep.subr.mxu0 %v526
        %1284 = vmatpush1.msra.mxu0 %v525
        %1285 = vmatprep.subr.mxu0 %v530
        %1286 = vmatpush1.msra.mxu0 %v529
        %1287 = vmatprep.subr.mxu0 %v534
        %1288 = vmatpush1.msra.mxu0 %v533
        %1289 = vmatprep.subr.mxu0 %v538
        %1290 = vmatpush1.msra.mxu0 %v537
        %1291 = vmatprep.subr.mxu0 %v542
        %1292 = vmatpush1.msra.mxu0 %v541
        %1293 = vmatprep.subr.mxu0 %v546
        %1294 = vmatpush1.msra.mxu0 %v545
        %1295 = vmatprep.subr.mxu0 %v550
        %1296 = vmatpush1.msra.mxu0 %v549
        %1297 = vmatprep.subr.mxu0 %v554
        %1298 = vmatpush1.msra.mxu0 %v553
        %1299 = vmatprep.subr.mxu0 %v558
        %1300 = vmatpush1.msra.mxu0 %v557
        %1301 = vmatprep.subr.mxu0 0.0
        %1302 = vmatpush1.msra.mxu0 0.0
        %1303 = vmatprep.subr.mxu0 0.0
        %1304 = vmatpush1.msra.mxu0 0.0
        %1305 = vmatprep.subr.mxu0 0.0
        %1306 = vmatpush1.msra.mxu0 0.0
        %1307 = vmatprep.subr.mxu0 0.0
        %1308 = vmatpush1.msra.mxu0 0.0
        %1309 = vmatprep.subr.mxu0 0.0
        %1310 = vmatpush1.msra.mxu0 0.0
        %1311 = vmatprep.subr.mxu0 0.0
        %1312 = vmatpush1.msra.mxu0 0.0
        %1313 = vmatprep.subr.mxu0 0.0
        %1314 = vmatpush1.msra.mxu0 0.0
        %1315 = vmatprep.subr.mxu0 0.0
        %1316 = vmatpush1.msra.mxu0 0.0
        %1317 = vmatprep.subr.mxu0 0.0
        %1318 = vmatpush1.msra.mxu0 0.0
        %1319 = vmatprep.subr.mxu0 0.0
        %1320 = vmatpush1.msra.mxu0 0.0
        %1321 = vmatprep.subr.mxu0 0.0
        %1322 = vmatpush1.msra.mxu0 0.0
        %1323 = vmatprep.subr.mxu0 0.0
        %1324 = vmatpush1.msra.mxu0 0.0
        %1325 = vmatprep.subr.mxu0 0.0
        %1326 = vmatpush1.msra.mxu0 0.0
        %1327 = vmatprep.subr.mxu0 0.0
        %1328 = vmatpush1.msra.mxu0 0.0
        %1329 = vmatprep.subr.mxu0 0.0
        %1330 = vmatpush1.msra.mxu0 0.0
        %1331 = vmatprep.subr.mxu0 0.0
        %1332 = vmatpush1.msra.mxu0 0.0
        %1333 = vmatprep.mubr.f32.mxu0 0.0
        %1334 = vmatmul.mubr.f32.gmra.mrb[0].mxu0 %v1253
        %v1335 = vpop.f32.mrb[0].mxu0
        %v1336 = vadd.f32 0.0, %v1335
        %v1337 = vpop.f32.mrb[0].mxu0
        %v1338 = vadd.f32 0.0, %v1337
        %1339 = vmatprep.mubr.f32.mxu0 0.0
        %1340 = vmatmul.mubr.f32.gmra.mrb[0].mxu0 %v1254
        %v1341 = vpop.f32.mrb[0].mxu0
        %v1342 = vadd.f32 0.0, %v1341
        %v1343 = vpop.f32.mrb[0].mxu0
        %v1344 = vadd.f32 0.0, %v1343
        %1345 = vmatprep.mubr.f32.mxu0 0.0
        %1346 = vmatmul.mubr.f32.gmra.mrb[0].mxu0 %v1255
        %v1347 = vpop.f32.mrb[0].mxu0
        %v1348 = vadd.f32 0.0, %v1347
        %v1349 = vpop.f32.mrb[0].mxu0
        %v1350 = vadd.f32 0.0, %v1349
        %1351 = vmatprep.mubr.f32.mxu0 0.0
        %1352 = vmatmul.mubr.f32.gmra.mrb[0].mxu0 %v1256
        %v1353 = vpop.f32.mrb[0].mxu0
        %v1354 = vadd.f32 0.0, %v1353
        %v1355 = vpop.f32.mrb[0].mxu0
        %v1356 = vadd.f32 0.0, %v1355
        %1357 = vmatprep.mubr.f32.mxu0 0.0
        %1358 = vmatmul.mubr.f32.gmra.mrb[0].mxu0 %v1257
        %v1359 = vpop.f32.mrb[0].mxu0
        %v1360 = vadd.f32 0.0, %v1359
        %v1361 = vpop.f32.mrb[0].mxu0
        %v1362 = vadd.f32 0.0, %v1361
        %1363 = vmatprep.mubr.f32.mxu0 0.0
        %1364 = vmatmul.mubr.f32.gmra.mrb[0].mxu0 %v1258
        %v1365 = vpop.f32.mrb[0].mxu0
        %v1366 = vadd.f32 0.0, %v1365
        %v1367 = vpop.f32.mrb[0].mxu0
        %v1368 = vadd.f32 0.0, %v1367
        %1369 = vmatprep.mubr.f32.mxu0 0.0
        %1370 = vmatmul.mubr.f32.gmra.mrb[0].mxu0 %v1259
        %v1371 = vpop.f32.mrb[0].mxu0
        %v1372 = vadd.f32 0.0, %v1371
        %v1373 = vpop.f32.mrb[0].mxu0
        %v1374 = vadd.f32 0.0, %v1373
        %1375 = vmatprep.mubr.f32.mxu0 0.0
        %1376 = vmatmul.mubr.f32.gmra.mrb[0].mxu0 %v1260
        %v1377 = vpop.f32.mrb[0].mxu0
        %v1378 = vadd.f32 0.0, %v1377
        %v1379 = vpop.f32.mrb[0].mxu0
        %v1380 = vadd.f32 0.0, %v1379
        %1381 = vmatprep.mubr.f32.mxu0 0.0
        %1382 = vmatmul.mubr.f32.gmra.mrb[0].mxu0 %v1261
        %v1383 = vpop.f32.mrb[0].mxu0
        %v1384 = vadd.f32 0.0, %v1383
        %v1385 = vpop.f32.mrb[0].mxu0
        %v1386 = vadd.f32 0.0, %v1385
        %1387 = vmatprep.mubr.f32.mxu0 0.0
        %1388 = vmatmul.mubr.f32.gmra.mrb[0].mxu0 %v1262
        %v1389 = vpop.f32.mrb[0].mxu0
        %v1390 = vadd.f32 0.0, %v1389
        %v1391 = vpop.f32.mrb[0].mxu0
        %v1392 = vadd.f32 0.0, %v1391
        %1393 = vmatprep.mubr.f32.mxu0 0.0
        %1394 = vmatmul.mubr.f32.gmra.mrb[0].mxu0 %v1263
        %v1395 = vpop.f32.mrb[0].mxu0
        %v1396 = vadd.f32 0.0, %v1395
        %v1397 = vpop.f32.mrb[0].mxu0
        %v1398 = vadd.f32 0.0, %v1397
        %1399 = vmatprep.mubr.f32.mxu0 0.0
        %1400 = vmatmul.mubr.f32.gmra.mrb[0].mxu0 %v1264
        %v1401 = vpop.f32.mrb[0].mxu0
        %v1402 = vadd.f32 0.0, %v1401
        %v1403 = vpop.f32.mrb[0].mxu0
        %v1404 = vadd.f32 0.0, %v1403
        %1405 = vmatprep.mubr.f32.mxu0 0.0
        %1406 = vmatmul.mubr.f32.gmra.mrb[0].mxu0 %v1265
        %v1407 = vpop.f32.mrb[0].mxu0
        %v1408 = vadd.f32 0.0, %v1407
        %v1409 = vpop.f32.mrb[0].mxu0
        %v1410 = vadd.f32 0.0, %v1409
        %1411 = vmatprep.mubr.f32.mxu0 0.0
        %1412 = vmatmul.mubr.f32.gmra.mrb[0].mxu0 %v1266
        %v1413 = vpop.f32.mrb[0].mxu0
        %v1414 = vadd.f32 0.0, %v1413
        %v1415 = vpop.f32.mrb[0].mxu0
        %v1416 = vadd.f32 0.0, %v1415
        %1417 = vmatprep.mubr.f32.mxu0 0.0
        %1418 = vmatmul.mubr.f32.gmra.mrb[0].mxu0 %v1267
        %v1419 = vpop.f32.mrb[0].mxu0
        %v1420 = vadd.f32 0.0, %v1419
        %v1421 = vpop.f32.mrb[0].mxu0
        %v1422 = vadd.f32 0.0, %v1421
        %1423 = vmatprep.mubr.f32.mxu0 0.0
        %1424 = vmatmul.mubr.f32.gmra.mrb[0].mxu0 %v1268
        %v1425 = vpop.f32.mrb[0].mxu0
        %v1426 = vadd.f32 0.0, %v1425
        %v1427 = vpop.f32.mrb[0].mxu0
        %v1428 = vadd.f32 0.0, %v1427
        %1429 = vdwg.mxu0
        %1430 = vmatprep.subr.mxu0 %v500
        %1431 = vmatpush1.msra.mxu0 %v499
        %1432 = vmatprep.subr.mxu0 %v504
        %1433 = vmatpush1.msra.mxu0 %v503
        %1434 = vmatprep.subr.mxu0 %v508
        %1435 = vmatpush1.msra.mxu0 %v507
        %1436 = vmatprep.subr.mxu0 %v512
        %1437 = vmatpush1.msra.mxu0 %v511
        %1438 = vmatprep.subr.mxu0 %v516
        %1439 = vmatpush1.msra.mxu0 %v515
        %1440 = vmatprep.subr.mxu0 %v520
        %1441 = vmatpush1.msra.mxu0 %v519
        %1442 = vmatprep.subr.mxu0 %v524
        %1443 = vmatpush1.msra.mxu0 %v523
        %1444 = vmatprep.subr.mxu0 %v528
        %1445 = vmatpush1.msra.mxu0 %v527
        %1446 = vmatprep.subr.mxu0 %v532
        %1447 = vmatpush1.msra.mxu0 %v531
        %1448 = vmatprep.subr.mxu0 %v536
        %1449 = vmatpush1.msra.mxu0 %v535
        %1450 = vmatprep.subr.mxu0 %v540
        %1451 = vmatpush1.msra.mxu0 %v539
        %1452 = vmatprep.subr.mxu0 %v544
        %1453 = vmatpush1.msra.mxu0 %v543
        %1454 = vmatprep.subr.mxu0 %v548
        %1455 = vmatpush1.msra.mxu0 %v547
        %1456 = vmatprep.subr.mxu0 %v552
        %1457 = vmatpush1.msra.mxu0 %v551
        %1458 = vmatprep.subr.mxu0 %v556
        %1459 = vmatpush1.msra.mxu0 %v555
        %1460 = vmatprep.subr.mxu0 %v560
        %1461 = vmatpush1.msra.mxu0 %v559
        %1462 = vmatprep.subr.mxu0 0.0
        %1463 = vmatpush1.msra.mxu0 0.0
        %1464 = vmatprep.subr.mxu0 0.0
        %1465 = vmatpush1.msra.mxu0 0.0
        %1466 = vmatprep.subr.mxu0 0.0
        %1467 = vmatpush1.msra.mxu0 0.0
        %1468 = vmatprep.subr.mxu0 0.0
        %1469 = vmatpush1.msra.mxu0 0.0
        %1470 = vmatprep.subr.mxu0 0.0
        %1471 = vmatpush1.msra.mxu0 0.0
        %1472 = vmatprep.subr.mxu0 0.0
        %1473 = vmatpush1.msra.mxu0 0.0
        %1474 = vmatprep.subr.mxu0 0.0
        %1475 = vmatpush1.msra.mxu0 0.0
        %1476 = vmatprep.subr.mxu0 0.0
        %1477 = vmatpush1.msra.mxu0 0.0
        %1478 = vmatprep.subr.mxu0 0.0
        %1479 = vmatpush1.msra.mxu0 0.0
        %1480 = vmatprep.subr.mxu0 0.0
        %1481 = vmatpush1.msra.mxu0 0.0
        %1482 = vmatprep.subr.mxu0 0.0
        %1483 = vmatpush1.msra.mxu0 0.0
        %1484 = vmatprep.subr.mxu0 0.0
        %1485 = vmatpush1.msra.mxu0 0.0
        %1486 = vmatprep.subr.mxu0 0.0
        %1487 = vmatpush1.msra.mxu0 0.0
        %1488 = vmatprep.subr.mxu0 0.0
        %1489 = vmatpush1.msra.mxu0 0.0
        %1490 = vmatprep.subr.mxu0 0.0
        %1491 = vmatpush1.msra.mxu0 0.0
        %1492 = vmatprep.subr.mxu0 0.0
        %1493 = vmatpush1.msra.mxu0 0.0
        %1494 = vmatprep.mubr.f32.mxu0 0.0
        %1495 = vmatmul.mubr.f32.gmra.mrb[0].mxu0 %v1253
        %v1496 = vpop.f32.mrb[0].mxu0
        %v1497 = vadd.f32 0.0, %v1496
        %v1498 = vpop.f32.mrb[0].mxu0
        %v1499 = vadd.f32 0.0, %v1498
        %1500 = vmatprep.mubr.f32.mxu0 0.0
        %1501 = vmatmul.mubr.f32.gmra.mrb[0].mxu0 %v1254
        %v1502 = vpop.f32.mrb[0].mxu0
        %v1503 = vadd.f32 0.0, %v1502
        %v1504 = vpop.f32.mrb[0].mxu0
        %v1505 = vadd.f32 0.0, %v1504
        %1506 = vmatprep.mubr.f32.mxu0 0.0
        %1507 = vmatmul.mubr.f32.gmra.mrb[0].mxu0 %v1255
        %v1508 = vpop.f32.mrb[0].mxu0
        %v1509 = vadd.f32 0.0, %v1508
        %v1510 = vpop.f32.mrb[0].mxu0
        %v1511 = vadd.f32 0.0, %v1510
        %1512 = vmatprep.mubr.f32.mxu0 0.0
        %1513 = vmatmul.mubr.f32.gmra.mrb[0].mxu0 %v1256
        %v1514 = vpop.f32.mrb[0].mxu0
        %v1515 = vadd.f32 0.0, %v1514
        %v1516 = vpop.f32.mrb[0].mxu0
        %v1517 = vadd.f32 0.0, %v1516
        %1518 = vmatprep.mubr.f32.mxu0 0.0
        %1519 = vmatmul.mubr.f32.gmra.mrb[0].mxu0 %v1257
        %v1520 = vpop.f32.mrb[0].mxu0
        %v1521 = vadd.f32 0.0, %v1520
        %v1522 = vpop.f32.mrb[0].mxu0
        %v1523 = vadd.f32 0.0, %v1522
        %1524 = vmatprep.mubr.f32.mxu0 0.0
        %1525 = vmatmul.mubr.f32.gmra.mrb[0].mxu0 %v1258
        %v1526 = vpop.f32.mrb[0].mxu0
        %v1527 = vadd.f32 0.0, %v1526
        %v1528 = vpop.f32.mrb[0].mxu0
        %v1529 = vadd.f32 0.0, %v1528
        %1530 = vmatprep.mubr.f32.mxu0 0.0
        %1531 = vmatmul.mubr.f32.gmra.mrb[0].mxu0 %v1259
        %v1532 = vpop.f32.mrb[0].mxu0
        %v1533 = vadd.f32 0.0, %v1532
        %v1534 = vpop.f32.mrb[0].mxu0
        %v1535 = vadd.f32 0.0, %v1534
        %1536 = vmatprep.mubr.f32.mxu0 0.0
        %1537 = vmatmul.mubr.f32.gmra.mrb[0].mxu0 %v1260
        %v1538 = vpop.f32.mrb[0].mxu0
        %v1539 = vadd.f32 0.0, %v1538
        %v1540 = vpop.f32.mrb[0].mxu0
        %v1541 = vadd.f32 0.0, %v1540
        %1542 = vmatprep.mubr.f32.mxu0 0.0
        %1543 = vmatmul.mubr.f32.gmra.mrb[0].mxu0 %v1261
        %v1544 = vpop.f32.mrb[0].mxu0
        %v1545 = vadd.f32 0.0, %v1544
        %v1546 = vpop.f32.mrb[0].mxu0
        %v1547 = vadd.f32 0.0, %v1546
        %1548 = vmatprep.mubr.f32.mxu0 0.0
        %1549 = vmatmul.mubr.f32.gmra.mrb[0].mxu0 %v1262
        %v1550 = vpop.f32.mrb[0].mxu0
        %v1551 = vadd.f32 0.0, %v1550
        %v1552 = vpop.f32.mrb[0].mxu0
        %v1553 = vadd.f32 0.0, %v1552
        %1554 = vmatprep.mubr.f32.mxu0 0.0
        %1555 = vmatmul.mubr.f32.gmra.mrb[0].mxu0 %v1263
        %v1556 = vpop.f32.mrb[0].mxu0
        %v1557 = vadd.f32 0.0, %v1556
        %v1558 = vpop.f32.mrb[0].mxu0
        %v1559 = vadd.f32 0.0, %v1558
        %1560 = vmatprep.mubr.f32.mxu0 0.0
        %1561 = vmatmul.mubr.f32.gmra.mrb[0].mxu0 %v1264
        %v1562 = vpop.f32.mrb[0].mxu0
        %v1563 = vadd.f32 0.0, %v1562
        %v1564 = vpop.f32.mrb[0].mxu0
        %v1565 = vadd.f32 0.0, %v1564
        %1566 = vmatprep.mubr.f32.mxu0 0.0
        %1567 = vmatmul.mubr.f32.gmra.mrb[0].mxu0 %v1265
        %v1568 = vpop.f32.mrb[0].mxu0
        %v1569 = vadd.f32 0.0, %v1568
        %v1570 = vpop.f32.mrb[0].mxu0
        %v1571 = vadd.f32 0.0, %v1570
        %1572 = vmatprep.mubr.f32.mxu0 0.0
        %1573 = vmatmul.mubr.f32.gmra.mrb[0].mxu0 %v1266
        %v1574 = vpop.f32.mrb[0].mxu0
        %v1575 = vadd.f32 0.0, %v1574
        %v1576 = vpop.f32.mrb[0].mxu0
        %v1577 = vadd.f32 0.0, %v1576
        %1578 = vmatprep.mubr.f32.mxu0 0.0
        %1579 = vmatmul.mubr.f32.gmra.mrb[0].mxu0 %v1267
        %v1580 = vpop.f32.mrb[0].mxu0
        %v1581 = vadd.f32 0.0, %v1580
        %v1582 = vpop.f32.mrb[0].mxu0
        %v1583 = vadd.f32 0.0, %v1582
        %1584 = vmatprep.mubr.f32.mxu0 0.0
        %1585 = vmatmul.mubr.f32.gmra.mrb[0].mxu0 %v1268
        %v1586 = vpop.f32.mrb[0].mxu0
        %v1587 = vadd.f32 0.0, %v1586
        %v1588 = vpop.f32.mrb[0].mxu0
        %v1589 = vadd.f32 0.0, %v1588
        %1590 = vdwg.mxu0
        // Predicated region
        $region45: #{hd_classifier_forward.1} parent=35 // pred_check
          %p1591 = pneg %p753
        $region46: #{hd_classifier_forward.1} parent=35 // pred_check_branch
          %1593 = sbr.rel (%p1591) target = $region48
        $region47: #{hd_classifier_forward.1} parent=35 // pred_region
          %v1594 = vld [vmem:[%s325] sm:$0xff]
          %v1595 = vld [vmem:[%s325 + $0x8] sm:$0xff]
          %v1596 = vld [vmem:[%s325 + $0x10] sm:$0xff]
          %v1597 = vld [vmem:[%s325 + $0x18] sm:$0xff]
          %v1598 = vld [vmem:[%s325 + $0x20] sm:$0xff]
          %v1599 = vld [vmem:[%s325 + $0x28] sm:$0xff]
          %v1600 = vld [vmem:[%s325 + $0x30] sm:$0xff]
          %v1601 = vld [vmem:[%s325 + $0x38] sm:$0xff]
          %v1602 = vld [vmem:[%s325 + $0x40] sm:$0xff]
          %v1603 = vld [vmem:[%s325 + $0x48] sm:$0xff]
          %v1604 = vld [vmem:[%s325 + $0x50] sm:$0xff]
          %v1605 = vld [vmem:[%s325 + $0x58] sm:$0xff]
          %v1606 = vld [vmem:[%s325 + $0x60] sm:$0xff]
          %v1607 = vld [vmem:[%s325 + $0x68] sm:$0xff]
          %v1608 = vld [vmem:[%s325 + $0x70] sm:$0xff]
          %v1609 = vld [vmem:[%s325 + $0x78] sm:$0xff]
          %v1610 = vld [vmem:[%s325 + $0x80] sm:$0xff]
          %v1611 = vld [vmem:[%s325 + $0x88] sm:$0xff]
          %v1612 = vld [vmem:[%s325 + $0x90] sm:$0xff]
          %v1613 = vld [vmem:[%s325 + $0x98] sm:$0xff]
          %v1614 = vld [vmem:[%s325 + $0xa0] sm:$0xff]
          %v1615 = vld [vmem:[%s325 + $0xa8] sm:$0xff]
          %v1616 = vld [vmem:[%s325 + $0xb0] sm:$0xff]
          %v1617 = vld [vmem:[%s325 + $0xb8] sm:$0xff]
          %v1618 = vld [vmem:[%s325 + $0xc0] sm:$0xff]
          %v1619 = vld [vmem:[%s325 + $0xc8] sm:$0xff]
          %v1620 = vld [vmem:[%s325 + $0xd0] sm:$0xff]
          %v1621 = vld [vmem:[%s325 + $0xd8] sm:$0xff]
          %v1622 = vld [vmem:[%s325 + $0xe0] sm:$0xff]
          %v1623 = vld [vmem:[%s325 + $0xe8] sm:$0xff]
          %v1624 = vld [vmem:[%s325 + $0xf0] sm:$0xff]
          %v1625 = vld [vmem:[%s325 + $0xf8] sm:$0xff]
          %v1626 = vld [vmem:[%s325 + $0x100] sm:$0xff]
          %v1627 = vld [vmem:[%s325 + $0x108] sm:$0xff]
          %v1628 = vld [vmem:[%s325 + $0x110] sm:$0xff]
          %v1629 = vld [vmem:[%s325 + $0x118] sm:$0xff]
          %v1630 = vld [vmem:[%s325 + $0x120] sm:$0xff]
          %v1631 = vld [vmem:[%s325 + $0x128] sm:$0xff]
          %v1632 = vld [vmem:[%s325 + $0x130] sm:$0xff]
          %v1633 = vld [vmem:[%s325 + $0x138] sm:$0xff]
          %v1634 = vld [vmem:[%s325 + $0x140] sm:$0xff]
          %v1635 = vld [vmem:[%s325 + $0x148] sm:$0xff]
          %v1636 = vld [vmem:[%s325 + $0x150] sm:$0xff]
          %v1637 = vld [vmem:[%s325 + $0x158] sm:$0xff]
          %v1638 = vld [vmem:[%s325 + $0x160] sm:$0xff]
          %v1639 = vld [vmem:[%s325 + $0x168] sm:$0xff]
          %v1640 = vld [vmem:[%s325 + $0x170] sm:$0xff]
          %v1641 = vld [vmem:[%s325 + $0x178] sm:$0xff]
          %v1642 = vld [vmem:[%s325 + $0x180] sm:$0xff]
          %v1643 = vld [vmem:[%s325 + $0x188] sm:$0xff]
          %v1644 = vld [vmem:[%s325 + $0x190] sm:$0xff]
          %v1645 = vld [vmem:[%s325 + $0x198] sm:$0xff]
          %v1646 = vld [vmem:[%s325 + $0x1a0] sm:$0xff]
          %v1647 = vld [vmem:[%s325 + $0x1a8] sm:$0xff]
          %v1648 = vld [vmem:[%s325 + $0x1b0] sm:$0xff]
          %v1649 = vld [vmem:[%s325 + $0x1b8] sm:$0xff]
          %v1650 = vld [vmem:[%s325 + $0x1c0] sm:$0xff]
          %v1651 = vld [vmem:[%s325 + $0x1c8] sm:$0xff]
          %v1652 = vld [vmem:[%s325 + $0x1d0] sm:$0xff]
          %v1653 = vld [vmem:[%s325 + $0x1d8] sm:$0xff]
          %v1654 = vld [vmem:[%s325 + $0x1e0] sm:$0xff]
          %v1655 = vld [vmem:[%s325 + $0x1e8] sm:$0xff]
          %v1656 = vld [vmem:[%s325 + $0x1f0] sm:$0xff]
          %v1657 = vld [vmem:[%s325 + $0x1f8] sm:$0xff]
          %1658 = vst [vmem:[%s347] sm:$0xff] %v1594
          %1659 = vst [vmem:[%s347 + $0x8] sm:$0xff] %v1595
          %1660 = vst [vmem:[%s347 + $0x10] sm:$0xff] %v1596
          %1661 = vst [vmem:[%s347 + $0x18] sm:$0xff] %v1597
          %1662 = vst [vmem:[%s347 + $0x20] sm:$0xff] %v1598
          %1663 = vst [vmem:[%s347 + $0x28] sm:$0xff] %v1599
          %1664 = vst [vmem:[%s347 + $0x30] sm:$0xff] %v1600
          %1665 = vst [vmem:[%s347 + $0x38] sm:$0xff] %v1601
          %1666 = vst [vmem:[%s347 + $0x40] sm:$0xff] %v1602
          %1667 = vst [vmem:[%s347 + $0x48] sm:$0xff] %v1603
          %1668 = vst [vmem:[%s347 + $0x50] sm:$0xff] %v1604
          %1669 = vst [vmem:[%s347 + $0x58] sm:$0xff] %v1605
          %1670 = vst [vmem:[%s347 + $0x60] sm:$0xff] %v1606
          %1671 = vst [vmem:[%s347 + $0x68] sm:$0xff] %v1607
          %1672 = vst [vmem:[%s347 + $0x70] sm:$0xff] %v1608
          %1673 = vst [vmem:[%s347 + $0x78] sm:$0xff] %v1609
          %1674 = vst [vmem:[%s347 + $0x80] sm:$0xff] %v1610
          %1675 = vst [vmem:[%s347 + $0x88] sm:$0xff] %v1611
          %1676 = vst [vmem:[%s347 + $0x90] sm:$0xff] %v1612
          %1677 = vst [vmem:[%s347 + $0x98] sm:$0xff] %v1613
          %1678 = vst [vmem:[%s347 + $0xa0] sm:$0xff] %v1614
          %1679 = vst [vmem:[%s347 + $0xa8] sm:$0xff] %v1615
          %1680 = vst [vmem:[%s347 + $0xb0] sm:$0xff] %v1616
          %1681 = vst [vmem:[%s347 + $0xb8] sm:$0xff] %v1617
          %1682 = vst [vmem:[%s347 + $0xc0] sm:$0xff] %v1618
          %1683 = vst [vmem:[%s347 + $0xc8] sm:$0xff] %v1619
          %1684 = vst [vmem:[%s347 + $0xd0] sm:$0xff] %v1620
          %1685 = vst [vmem:[%s347 + $0xd8] sm:$0xff] %v1621
          %1686 = vst [vmem:[%s347 + $0xe0] sm:$0xff] %v1622
          %1687 = vst [vmem:[%s347 + $0xe8] sm:$0xff] %v1623
          %1688 = vst [vmem:[%s347 + $0xf0] sm:$0xff] %v1624
          %1689 = vst [vmem:[%s347 + $0xf8] sm:$0xff] %v1625
          %1690 = vst [vmem:[%s347 + $0x100] sm:$0xff] %v1626
          %1691 = vst [vmem:[%s347 + $0x108] sm:$0xff] %v1627
          %1692 = vst [vmem:[%s347 + $0x110] sm:$0xff] %v1628
          %1693 = vst [vmem:[%s347 + $0x118] sm:$0xff] %v1629
          %1694 = vst [vmem:[%s347 + $0x120] sm:$0xff] %v1630
          %1695 = vst [vmem:[%s347 + $0x128] sm:$0xff] %v1631
          %1696 = vst [vmem:[%s347 + $0x130] sm:$0xff] %v1632
          %1697 = vst [vmem:[%s347 + $0x138] sm:$0xff] %v1633
          %1698 = vst [vmem:[%s347 + $0x140] sm:$0xff] %v1634
          %1699 = vst [vmem:[%s347 + $0x148] sm:$0xff] %v1635
          %1700 = vst [vmem:[%s347 + $0x150] sm:$0xff] %v1636
          %1701 = vst [vmem:[%s347 + $0x158] sm:$0xff] %v1637
          %1702 = vst [vmem:[%s347 + $0x160] sm:$0xff] %v1638
          %1703 = vst [vmem:[%s347 + $0x168] sm:$0xff] %v1639
          %1704 = vst [vmem:[%s347 + $0x170] sm:$0xff] %v1640
          %1705 = vst [vmem:[%s347 + $0x178] sm:$0xff] %v1641
          %1706 = vst [vmem:[%s347 + $0x180] sm:$0xff] %v1642
          %1707 = vst [vmem:[%s347 + $0x188] sm:$0xff] %v1643
          %1708 = vst [vmem:[%s347 + $0x190] sm:$0xff] %v1644
          %1709 = vst [vmem:[%s347 + $0x198] sm:$0xff] %v1645
          %1710 = vst [vmem:[%s347 + $0x1a0] sm:$0xff] %v1646
          %1711 = vst [vmem:[%s347 + $0x1a8] sm:$0xff] %v1647
          %1712 = vst [vmem:[%s347 + $0x1b0] sm:$0xff] %v1648
          %1713 = vst [vmem:[%s347 + $0x1b8] sm:$0xff] %v1649
          %1714 = vst [vmem:[%s347 + $0x1c0] sm:$0xff] %v1650
          %1715 = vst [vmem:[%s347 + $0x1c8] sm:$0xff] %v1651
          %1716 = vst [vmem:[%s347 + $0x1d0] sm:$0xff] %v1652
          %1717 = vst [vmem:[%s347 + $0x1d8] sm:$0xff] %v1653
          %1718 = vst [vmem:[%s347 + $0x1e0] sm:$0xff] %v1654
          %1719 = vst [vmem:[%s347 + $0x1e8] sm:$0xff] %v1655
          %1720 = vst [vmem:[%s347 + $0x1f0] sm:$0xff] %v1656
          %1721 = vst [vmem:[%s347 + $0x1f8] sm:$0xff] %v1657
        $region48: #{hd_classifier_forward.1} parent=35 // pred_fallthru
          _
        %v1722 = vld [vmem:[%s347] sm:$0xff]
        %v1723 = vld [vmem:[%s347 + $0x8] sm:$0xff]
        %v1724 = vld [vmem:[%s347 + $0x10] sm:$0xff]
        %v1725 = vld [vmem:[%s347 + $0x18] sm:$0xff]
        %v1726 = vld [vmem:[%s347 + $0x20] sm:$0xff]
        %v1727 = vld [vmem:[%s347 + $0x28] sm:$0xff]
        %v1728 = vld [vmem:[%s347 + $0x30] sm:$0xff]
        %v1729 = vld [vmem:[%s347 + $0x38] sm:$0xff]
        %v1730 = vld [vmem:[%s347 + $0x40] sm:$0xff]
        %v1731 = vld [vmem:[%s347 + $0x48] sm:$0xff]
        %v1732 = vld [vmem:[%s347 + $0x50] sm:$0xff]
        %v1733 = vld [vmem:[%s347 + $0x58] sm:$0xff]
        %v1734 = vld [vmem:[%s347 + $0x60] sm:$0xff]
        %v1735 = vld [vmem:[%s347 + $0x68] sm:$0xff]
        %v1736 = vld [vmem:[%s347 + $0x70] sm:$0xff]
        %v1737 = vld [vmem:[%s347 + $0x78] sm:$0xff]
        %v1738 = vld [vmem:[%s347 + $0x80] sm:$0xff]
        %v1739 = vld [vmem:[%s347 + $0x88] sm:$0xff]
        %v1740 = vld [vmem:[%s347 + $0x90] sm:$0xff]
        %v1741 = vld [vmem:[%s347 + $0x98] sm:$0xff]
        %v1742 = vld [vmem:[%s347 + $0xa0] sm:$0xff]
        %v1743 = vld [vmem:[%s347 + $0xa8] sm:$0xff]
        %v1744 = vld [vmem:[%s347 + $0xb0] sm:$0xff]
        %v1745 = vld [vmem:[%s347 + $0xb8] sm:$0xff]
        %v1746 = vld [vmem:[%s347 + $0xc0] sm:$0xff]
        %v1747 = vld [vmem:[%s347 + $0xc8] sm:$0xff]
        %v1748 = vld [vmem:[%s347 + $0xd0] sm:$0xff]
        %v1749 = vld [vmem:[%s347 + $0xd8] sm:$0xff]
        %v1750 = vld [vmem:[%s347 + $0xe0] sm:$0xff]
        %v1751 = vld [vmem:[%s347 + $0xe8] sm:$0xff]
        %v1752 = vld [vmem:[%s347 + $0xf0] sm:$0xff]
        %v1753 = vld [vmem:[%s347 + $0xf8] sm:$0xff]
        %v1754 = vld [vmem:[%s347 + $0x100] sm:$0xff]
        %v1755 = vld [vmem:[%s347 + $0x108] sm:$0xff]
        %v1756 = vld [vmem:[%s347 + $0x110] sm:$0xff]
        %v1757 = vld [vmem:[%s347 + $0x118] sm:$0xff]
        %v1758 = vld [vmem:[%s347 + $0x120] sm:$0xff]
        %v1759 = vld [vmem:[%s347 + $0x128] sm:$0xff]
        %v1760 = vld [vmem:[%s347 + $0x130] sm:$0xff]
        %v1761 = vld [vmem:[%s347 + $0x138] sm:$0xff]
        %v1762 = vld [vmem:[%s347 + $0x140] sm:$0xff]
        %v1763 = vld [vmem:[%s347 + $0x148] sm:$0xff]
        %v1764 = vld [vmem:[%s347 + $0x150] sm:$0xff]
        %v1765 = vld [vmem:[%s347 + $0x158] sm:$0xff]
        %v1766 = vld [vmem:[%s347 + $0x160] sm:$0xff]
        %v1767 = vld [vmem:[%s347 + $0x168] sm:$0xff]
        %v1768 = vld [vmem:[%s347 + $0x170] sm:$0xff]
        %v1769 = vld [vmem:[%s347 + $0x178] sm:$0xff]
        %v1770 = vld [vmem:[%s347 + $0x180] sm:$0xff]
        %v1771 = vld [vmem:[%s347 + $0x188] sm:$0xff]
        %v1772 = vld [vmem:[%s347 + $0x190] sm:$0xff]
        %v1773 = vld [vmem:[%s347 + $0x198] sm:$0xff]
        %v1774 = vld [vmem:[%s347 + $0x1a0] sm:$0xff]
        %v1775 = vld [vmem:[%s347 + $0x1a8] sm:$0xff]
        %v1776 = vld [vmem:[%s347 + $0x1b0] sm:$0xff]
        %v1777 = vld [vmem:[%s347 + $0x1b8] sm:$0xff]
        %v1778 = vld [vmem:[%s347 + $0x1c0] sm:$0xff]
        %v1779 = vld [vmem:[%s347 + $0x1c8] sm:$0xff]
        %v1780 = vld [vmem:[%s347 + $0x1d0] sm:$0xff]
        %v1781 = vld [vmem:[%s347 + $0x1d8] sm:$0xff]
        %v1782 = vld [vmem:[%s347 + $0x1e0] sm:$0xff]
        %v1783 = vld [vmem:[%s347 + $0x1e8] sm:$0xff]
        %v1784 = vld [vmem:[%s347 + $0x1f0] sm:$0xff]
        %v1785 = vld [vmem:[%s347 + $0x1f8] sm:$0xff]
        %v1786 = vadd.f32 %v1722, %v1336
        %v1787 = vadd.f32 %v1723, %v1338
        %v1788 = vadd.f32 %v1724, %v1497
        %v1789 = vadd.f32 %v1725, %v1499
        %v1790 = vadd.f32 %v1726, %v1342
        %v1791 = vadd.f32 %v1727, %v1344
        %v1792 = vadd.f32 %v1728, %v1503
        %v1793 = vadd.f32 %v1729, %v1505
        %v1794 = vadd.f32 %v1730, %v1348
        %v1795 = vadd.f32 %v1731, %v1350
        %v1796 = vadd.f32 %v1732, %v1509
        %v1797 = vadd.f32 %v1733, %v1511
        %v1798 = vadd.f32 %v1734, %v1354
        %v1799 = vadd.f32 %v1735, %v1356
        %v1800 = vadd.f32 %v1736, %v1515
        %v1801 = vadd.f32 %v1737, %v1517
        %v1802 = vadd.f32 %v1738, %v1360
        %v1803 = vadd.f32 %v1739, %v1362
        %v1804 = vadd.f32 %v1740, %v1521
        %v1805 = vadd.f32 %v1741, %v1523
        %v1806 = vadd.f32 %v1742, %v1366
        %v1807 = vadd.f32 %v1743, %v1368
        %v1808 = vadd.f32 %v1744, %v1527
        %v1809 = vadd.f32 %v1745, %v1529
        %v1810 = vadd.f32 %v1746, %v1372
        %v1811 = vadd.f32 %v1747, %v1374
        %v1812 = vadd.f32 %v1748, %v1533
        %v1813 = vadd.f32 %v1749, %v1535
        %v1814 = vadd.f32 %v1750, %v1378
        %v1815 = vadd.f32 %v1751, %v1380
        %v1816 = vadd.f32 %v1752, %v1539
        %v1817 = vadd.f32 %v1753, %v1541
        %v1818 = vadd.f32 %v1754, %v1384
        %v1819 = vadd.f32 %v1755, %v1386
        %v1820 = vadd.f32 %v1756, %v1545
        %v1821 = vadd.f32 %v1757, %v1547
        %v1822 = vadd.f32 %v1758, %v1390
        %v1823 = vadd.f32 %v1759, %v1392
        %v1824 = vadd.f32 %v1760, %v1551
        %v1825 = vadd.f32 %v1761, %v1553
        %v1826 = vadd.f32 %v1762, %v1396
        %v1827 = vadd.f32 %v1763, %v1398
        %v1828 = vadd.f32 %v1764, %v1557
        %v1829 = vadd.f32 %v1765, %v1559
        %v1830 = vadd.f32 %v1766, %v1402
        %v1831 = vadd.f32 %v1767, %v1404
        %v1832 = vadd.f32 %v1768, %v1563
        %v1833 = vadd.f32 %v1769, %v1565
        %v1834 = vadd.f32 %v1770, %v1408
        %v1835 = vadd.f32 %v1771, %v1410
        %v1836 = vadd.f32 %v1772, %v1569
        %v1837 = vadd.f32 %v1773, %v1571
        %v1838 = vadd.f32 %v1774, %v1414
        %v1839 = vadd.f32 %v1775, %v1416
        %v1840 = vadd.f32 %v1776, %v1575
        %v1841 = vadd.f32 %v1777, %v1577
        %v1842 = vadd.f32 %v1778, %v1420
        %v1843 = vadd.f32 %v1779, %v1422
        %v1844 = vadd.f32 %v1780, %v1581
        %v1845 = vadd.f32 %v1781, %v1583
        %v1846 = vadd.f32 %v1782, %v1426
        %v1847 = vadd.f32 %v1783, %v1428
        %v1848 = vadd.f32 %v1784, %v1587
        %v1849 = vadd.f32 %v1785, %v1589
        %1850 = vst [vmem:[%s347] sm:$0xff] %v1786
        %1851 = vst [vmem:[%s347 + $0x8] sm:$0xff] %v1787
        %1852 = vst [vmem:[%s347 + $0x10] sm:$0xff] %v1788
        %1853 = vst [vmem:[%s347 + $0x18] sm:$0xff] %v1789
        %1854 = vst [vmem:[%s347 + $0x20] sm:$0xff] %v1790
        %1855 = vst [vmem:[%s347 + $0x28] sm:$0xff] %v1791
        %1856 = vst [vmem:[%s347 + $0x30] sm:$0xff] %v1792
        %1857 = vst [vmem:[%s347 + $0x38] sm:$0xff] %v1793
        %1858 = vst [vmem:[%s347 + $0x40] sm:$0xff] %v1794
        %1859 = vst [vmem:[%s347 + $0x48] sm:$0xff] %v1795
        %1860 = vst [vmem:[%s347 + $0x50] sm:$0xff] %v1796
        %1861 = vst [vmem:[%s347 + $0x58] sm:$0xff] %v1797
        %1862 = vst [vmem:[%s347 + $0x60] sm:$0xff] %v1798
        %1863 = vst [vmem:[%s347 + $0x68] sm:$0xff] %v1799
        %1864 = vst [vmem:[%s347 + $0x70] sm:$0xff] %v1800
        %1865 = vst [vmem:[%s347 + $0x78] sm:$0xff] %v1801
        %1866 = vst [vmem:[%s347 + $0x80] sm:$0xff] %v1802
        %1867 = vst [vmem:[%s347 + $0x88] sm:$0xff] %v1803
        %1868 = vst [vmem:[%s347 + $0x90] sm:$0xff] %v1804
        %1869 = vst [vmem:[%s347 + $0x98] sm:$0xff] %v1805
        %1870 = vst [vmem:[%s347 + $0xa0] sm:$0xff] %v1806
        %1871 = vst [vmem:[%s347 + $0xa8] sm:$0xff] %v1807
        %1872 = vst [vmem:[%s347 + $0xb0] sm:$0xff] %v1808
        %1873 = vst [vmem:[%s347 + $0xb8] sm:$0xff] %v1809
        %1874 = vst [vmem:[%s347 + $0xc0] sm:$0xff] %v1810
        %1875 = vst [vmem:[%s347 + $0xc8] sm:$0xff] %v1811
        %1876 = vst [vmem:[%s347 + $0xd0] sm:$0xff] %v1812
        %1877 = vst [vmem:[%s347 + $0xd8] sm:$0xff] %v1813
        %1878 = vst [vmem:[%s347 + $0xe0] sm:$0xff] %v1814
        %1879 = vst [vmem:[%s347 + $0xe8] sm:$0xff] %v1815
        %1880 = vst [vmem:[%s347 + $0xf0] sm:$0xff] %v1816
        %1881 = vst [vmem:[%s347 + $0xf8] sm:$0xff] %v1817
        %1882 = vst [vmem:[%s347 + $0x100] sm:$0xff] %v1818
        %1883 = vst [vmem:[%s347 + $0x108] sm:$0xff] %v1819
        %1884 = vst [vmem:[%s347 + $0x110] sm:$0xff] %v1820
        %1885 = vst [vmem:[%s347 + $0x118] sm:$0xff] %v1821
        %1886 = vst [vmem:[%s347 + $0x120] sm:$0xff] %v1822
        %1887 = vst [vmem:[%s347 + $0x128] sm:$0xff] %v1823
        %1888 = vst [vmem:[%s347 + $0x130] sm:$0xff] %v1824
        %1889 = vst [vmem:[%s347 + $0x138] sm:$0xff] %v1825
        %1890 = vst [vmem:[%s347 + $0x140] sm:$0xff] %v1826
        %1891 = vst [vmem:[%s347 + $0x148] sm:$0xff] %v1827
        %1892 = vst [vmem:[%s347 + $0x150] sm:$0xff] %v1828
        %1893 = vst [vmem:[%s347 + $0x158] sm:$0xff] %v1829
        %1894 = vst [vmem:[%s347 + $0x160] sm:$0xff] %v1830
        %1895 = vst [vmem:[%s347 + $0x168] sm:$0xff] %v1831
        %1896 = vst [vmem:[%s347 + $0x170] sm:$0xff] %v1832
        %1897 = vst [vmem:[%s347 + $0x178] sm:$0xff] %v1833
        %1898 = vst [vmem:[%s347 + $0x180] sm:$0xff] %v1834
        %1899 = vst [vmem:[%s347 + $0x188] sm:$0xff] %v1835
        %1900 = vst [vmem:[%s347 + $0x190] sm:$0xff] %v1836
        %1901 = vst [vmem:[%s347 + $0x198] sm:$0xff] %v1837
        %1902 = vst [vmem:[%s347 + $0x1a0] sm:$0xff] %v1838
        %1903 = vst [vmem:[%s347 + $0x1a8] sm:$0xff] %v1839
        %1904 = vst [vmem:[%s347 + $0x1b0] sm:$0xff] %v1840
        %1905 = vst [vmem:[%s347 + $0x1b8] sm:$0xff] %v1841
        %1906 = vst [vmem:[%s347 + $0x1c0] sm:$0xff] %v1842
        %1907 = vst [vmem:[%s347 + $0x1c8] sm:$0xff] %v1843
        %1908 = vst [vmem:[%s347 + $0x1d0] sm:$0xff] %v1844
        %1909 = vst [vmem:[%s347 + $0x1d8] sm:$0xff] %v1845
        %1910 = vst [vmem:[%s347 + $0x1e0] sm:$0xff] %v1846
        %1911 = vst [vmem:[%s347 + $0x1e8] sm:$0xff] %v1847
        %1912 = vst [vmem:[%s347 + $0x1f0] sm:$0xff] %v1848
        %1913 = vst [vmem:[%s347 + $0x1f8] sm:$0xff] %v1849
        %s1914 = smul.u32 16, %s25
        %p1915 = scmp.lt.s32.totalorder %s1914, 31
        %s1916 = scalar_select %p1915, %s1914, 31
        %p1917 = scmp.lt.s32.totalorder %s24, 0
        %s1918 = scalar_select %p1917, %s24, 0
        %s1919 = sadd.s32 %s1918, %s1916
        %s1920 = smul.addr %s1919, 8
        %s1921 = scalar_lea.vmem %s4, %s1920
        %s1922 = smul.u32 16, %s24
        %p1923 = scmp.lt.s32.totalorder %s1922, 15
        %s1924 = scalar_select %p1923, %s1922, 15
        %s1925 = smul.addr %s1924, 4
        %s1926 = smul.addr %s1925, 8
        %s1927 = scalar_lea.vmem %s5, %s1926
        // Predicated region
        $region49: #{hd_classifier_forward.1} parent=35 // pred_check
          %p1928 = pneg %p156
        $region50: #{hd_classifier_forward.1} parent=35 // pred_check_branch
          %1930 = sbr.rel (%p1928) target = $region52
        $region51: #{hd_classifier_forward.1} parent=35 // pred_region
          %s1931 = smul.u32 16, %s25
        $region52: #{hd_classifier_forward.1} parent=35 // pred_fallthru
          _
        // Predicated region
        $region53: #{hd_classifier_forward.1} parent=35 // pred_check
          %p1932 = pneg %p182
        $region54: #{hd_classifier_forward.1} parent=35 // pred_check_branch
          %1934 = sbr.rel (%p1932) target = $region56
        $region55: #{hd_classifier_forward.1} parent=35 // pred_region
          %s1935 = smul.u32 16, %s24
        $region56: #{hd_classifier_forward.1} parent=35 // pred_fallthru
          _
        // Predicated region
        $region57: #{hd_classifier_forward.1} parent=35 // pred_check
          %p1936 = pneg %p182
        $region58: #{hd_classifier_forward.1} parent=35 // pred_check_branch
          %1938 = sbr.rel (%p1936) target = $region60
        $region59: #{hd_classifier_forward.1} parent=35 // pred_region
          %s1939 = smul.u32 16, %s24
          %p1940 = scmp.lt.s32.totalorder %s1939, 15
          %s1941 = scalar_select %p1940, %s1939, 15
          %s1942 = smul.addr %s1941, 4
          %s1943 = smul.addr %s1942, 8
          %s1944 = scalar_lea.vmem %s5, %s1943
        $region60: #{hd_classifier_forward.1} parent=35 // pred_fallthru
          _
      $region36: #{hd_classifier_forward.1} parent=5 // pred_fallthru
        _
      %p1945 = scmp.le.s32.totalorder 2, %s15
      // Predicated region
      $region61: #{hd_classifier_forward.1} parent=5 // pred_check
        %p1946 = pneg %p1945
      $region62: #{hd_classifier_forward.1} parent=5 // pred_check_branch
        %1948 = sbr.rel (%p1946) target = $region64
      $region63: #{hd_classifier_forward.1} parent=5 // pred_region
        %s1949 = ssub.s32 %s15, 2
        // Predicated region
        $region65: #{hd_classifier_forward.1} parent=63 // pred_check
          %p1950 = pneg %p162
        $region66: #{hd_classifier_forward.1} parent=63 // pred_check_branch
          %1952 = sbr.rel (%p1950) target = $region68
        $region67: #{hd_classifier_forward.1} parent=63 // pred_region
          %s1953 = smul.u32 16, %s27
          %p1954 = scmp.lt.s32.totalorder %s1953, 31
          %s1955 = scalar_select %p1954, %s1953, 31
          %p1956 = scmp.lt.s32.totalorder %s26, 0
          %s1957 = scalar_select %p1956, %s26, 0
          %s1958 = sadd.s32 %s1957, %s1955
          %s1959 = smul.addr %s1958, 8
          %s1960 = scalar_lea.vmem %s4, %s1959
        $region68: #{hd_classifier_forward.1} parent=63 // pred_fallthru
          _
      $region64: #{hd_classifier_forward.1} parent=5 // pred_fallthru
        _
    $region6: #{hd_classifier_forward.1} parent=1 // loop_footer
      %s19 = sadd.s32 1, %s15
    $region7: #{hd_classifier_forward.1} parent=1 // loop_footer_branch
      %14 = sbr.rel target = $region3
    $region8: #{hd_classifier_forward.1} parent=1 // loop_exit
      _
    %1961 = vsyncpa [#allocation4], 1
    %s1962 = scalar_lea.sflag [#allocation4], 1
    %1963 = vsyncpa %s1962, 1

</llo_original>
